<compile_context>
chip_gen: v7x
topology: tpu7x:2x2x1
jax: 0.10.0
libtpu: 0.0.40
codegen_flags: <defaults>
</compile_context>

<pallas_src>
import jax
import jax.numpy as jnp
from jax.experimental import pallas as pl
from jax.experimental.pallas import tpu as pltpu

HIDDEN = 50
LANES = 128


def _round_up(a, b):
    return (a + b - 1) // b * b


def _make_kernel(chunk_rows, num_chunks):
    """Kernel over one (block_rows, 128) lane-dense batch tile.

    Weights/biases are f32 scalars in SMEM; the two 'matmuls' (in/out features
    of 1) are done on the VPU as scalar-broadcast mul/add + accumulate over the
    50 hidden units, unrolled at trace time.  The tile is processed in
    `chunk_rows`-row slices so the unrolled chain stays register-resident.
    """

    def kernel(w1_ref, b1_ref, w2_ref, b2_ref, x_ref, o_ref):
        b2 = b2_ref[0]

        def chunk_body(c, carry):
            r0 = pl.multiple_of(c * chunk_rows, chunk_rows)
            x = x_ref[pl.ds(r0, chunk_rows), :]
            acc = jnp.zeros_like(x)
            # 50 x (mul, add, max, mul, add) on the VPU; scalars from SMEM.
            for j in range(HIDDEN):
                h = jnp.maximum(x * w1_ref[j] + b1_ref[j], 0.0)  # Linear(1,50) col j + ReLU
                acc = acc + h * w2_ref[j]                        # Linear(50,1) contribution
            z = acc + b2
            # Exact, stable sigmoid: one tanh on the (otherwise idle) EUP slot.
            o_ref[pl.ds(r0, chunk_rows), :] = 0.5 * jnp.tanh(0.5 * z) + 0.5
            return carry

        jax.lax.fori_loop(0, num_chunks, chunk_body, 0)

    return kernel


def net_forward(x, w1, b1, w2, b2, *, max_block_rows=1024, chunk_rows=32):
    """x: (N, 1) float32 -> (N, 1) float32.  Eval-mode dropout (identity)."""
    n = x.shape[0]

    # Lane-dense layout: flatten the batch and fold it into (rows, 128).
    rows_needed = max(1, pl.cdiv(n, LANES))
    rows = _round_up(rows_needed, 8)

    # Tile sizing: as big as max_block_rows, but guarantee >=2 grid tiles when
    # the batch permits so both v7x TensorCores get work ("parallel" axis).
    blk = min(max_block_rows, rows)
    if rows >= 16:
        blk = min(blk, max(8, (rows // 2) // 8 * 8))
    chunk = min(chunk_rows, blk)
    blk = _round_up(blk, chunk)          # block must be a whole number of chunks
    rows_p = _round_up(rows, blk)
    num_tiles = rows_p // blk
    num_chunks = blk // chunk
    n_pad = rows_p * LANES

    x_flat = x.reshape(-1).astype(jnp.float32)
    if n_pad != n:
        # Only the ragged tail of the last tile is padded.
        x_flat = jnp.pad(x_flat, (0, n_pad - n))
    x_tiled = x_flat.reshape(rows_p, LANES)

    smem = pl.BlockSpec(memory_space=pltpu.MemorySpace.SMEM)
    x_spec = pl.BlockSpec((blk, LANES), lambda i: (i, 0))
    o_spec = pl.BlockSpec((blk, LANES), lambda i: (i, 0))

    out = pl.pallas_call(
        _make_kernel(chunk, num_chunks),
        out_shape=jax.ShapeDtypeStruct((rows_p, LANES), jnp.float32),
        grid=(num_tiles,),
        in_specs=[smem, smem, smem, smem, x_spec],
        out_specs=o_spec,
        compiler_params=pltpu.CompilerParams(
            # Batch tiles are independent -> shard across TensorCores.
            dimension_semantics=("parallel",),
        ),
    )(
        w1.reshape(HIDDEN).astype(jnp.float32),
        b1.reshape(HIDDEN).astype(jnp.float32),
        w2.reshape(HIDDEN).astype(jnp.float32),
        b2.reshape(1).astype(jnp.float32),
        x_tiled,
    )

    return out.reshape(-1)[:n].reshape(n, 1)


def init_params(key):
    """Deterministic init mimicking PyTorch Linear's U(-1/sqrt(fan_in), 1/sqrt(fan_in)).

    Stored flattened: w1/b1/w2 as (50,), b2 as (1,)."""
    k1, k2, k3, k4 = jax.random.split(key, 4)
    bound1 = 1.0 / jnp.sqrt(1.0)   # fan_in = 1
    bound2 = 1.0 / jnp.sqrt(50.0)  # fan_in = 50
    w1 = jax.random.uniform(k1, (HIDDEN,), jnp.float32, -bound1, bound1)
    b1 = jax.random.uniform(k2, (HIDDEN,), jnp.float32, -bound1, bound1)
    w2 = jax.random.uniform(k3, (HIDDEN,), jnp.float32, -bound2, bound2)
    b2 = jax.random.uniform(k4, (1,), jnp.float32, -bound2, bound2)
    return w1, b1, w2, b2


if __name__ == "__main__":
    key = jax.random.PRNGKey(0)
    k_params, k_x = jax.random.split(key)

    w1, b1, w2, b2 = init_params(k_params)

    # Small batch of scalar inputs, shape (200, 1) — not a multiple of 128 so
    # the lane-padding path is exercised too.
    n = 200
    x = jax.random.uniform(k_x, (n, 1), jnp.float32, 0.0, 2.0)

    out = jax.block_until_ready(net_forward(x, w1, b1, w2, b2))

    # Pure-JAX reference (eval-mode dropout = identity).
    h_ref = jnp.maximum(x @ w1[None, :] + b1[None, :], 0.0)
    ref = 1.0 / (1.0 + jnp.exp(-(h_ref @ w2[:, None] + b2)))

    assert out.shape == (n, 1)
    assert jnp.allclose(out, ref, atol=1e-4, rtol=1e-4), "mismatch vs reference"

    print("KERNEL_OK")
</pallas_src>

<mosaic_0001>
module attributes {stable_mosaic.version = 11 : i64} {
  func.func @kernel(%arg0: i32, %arg1: memref<50xf32, #tpu.memory_space<smem>>, %arg2: memref<50xf32, #tpu.memory_space<smem>>, %arg3: memref<50xf32, #tpu.memory_space<smem>>, %arg4: memref<1xf32, #tpu.memory_space<smem>>, %arg5: memref<8x128xf32, #tpu.memory_space<vmem>>, %arg6: memref<8x128xf32, #tpu.memory_space<vmem>>) attributes {dimension_semantics = [#tpu.dimension_semantics<parallel>], iteration_bounds = array<i64: 1>, scalar_prefetch = 0 : i64, scratch_operands = 0 : i64, tpu.core_type = #tpu.core_type<tc>, window_params = [{transform_indices = @transform_0, window_bounds = array<i64: 50>}, {transform_indices = @transform_1, window_bounds = array<i64: 50>}, {transform_indices = @transform_2, window_bounds = array<i64: 50>}, {transform_indices = @transform_3, window_bounds = array<i64: 1>}, {transform_indices = @transform_4, window_bounds = array<i64: 8, 128>}, {transform_indices = @transform_5, window_bounds = array<i64: 8, 128>}]} {
    %c0 = arith.constant 0 : index
    %0 = memref.load %arg4[%c0] : memref<1xf32, #tpu.memory_space<smem>>
    %c0_i32 = arith.constant 0 : i32
    %c8_i32 = arith.constant 8 : i32
    %1 = arith.muli %c0_i32, %c8_i32 : i32
    %2 = tpu.assume_multiple %1, 8 : i32
    %3 = arith.index_cast %2 : i32 to index
    %c0_0 = arith.constant 0 : index
    %4 = vector.load %arg5[%3, %c0_0] : memref<8x128xf32, #tpu.memory_space<vmem>>, vector<8x128xf32>
    %cst = arith.constant 0.000000e+00 : f32
    %5 = vector.broadcast %cst : f32 to vector<8x128xf32>
    %c0_1 = arith.constant 0 : index
    %6 = memref.load %arg1[%c0_1] : memref<50xf32, #tpu.memory_space<smem>>
    %7 = vector.broadcast %6 : f32 to vector<8x128xf32>
    %8 = arith.mulf %4, %7 : vector<8x128xf32>
    %c0_2 = arith.constant 0 : index
    %9 = memref.load %arg2[%c0_2] : memref<50xf32, #tpu.memory_space<smem>>
    %10 = vector.broadcast %9 : f32 to vector<8x128xf32>
    %11 = arith.addf %8, %10 : vector<8x128xf32>
    %cst_3 = arith.constant 0.000000e+00 : f32
    %12 = vector.broadcast %cst_3 : f32 to vector<8x128xf32>
    %13 = arith.maximumf %11, %12 : vector<8x128xf32>
    %c0_4 = arith.constant 0 : index
    %14 = memref.load %arg3[%c0_4] : memref<50xf32, #tpu.memory_space<smem>>
    %15 = vector.broadcast %14 : f32 to vector<8x128xf32>
    %16 = arith.mulf %13, %15 : vector<8x128xf32>
    %17 = arith.addf %5, %16 : vector<8x128xf32>
    %c1 = arith.constant 1 : index
    %18 = memref.load %arg1[%c1] : memref<50xf32, #tpu.memory_space<smem>>
    %19 = vector.broadcast %18 : f32 to vector<8x128xf32>
    %20 = arith.mulf %4, %19 : vector<8x128xf32>
    %c1_5 = arith.constant 1 : index
    %21 = memref.load %arg2[%c1_5] : memref<50xf32, #tpu.memory_space<smem>>
    %22 = vector.broadcast %21 : f32 to vector<8x128xf32>
    %23 = arith.addf %20, %22 : vector<8x128xf32>
    %cst_6 = arith.constant 0.000000e+00 : f32
    %24 = vector.broadcast %cst_6 : f32 to vector<8x128xf32>
    %25 = arith.maximumf %23, %24 : vector<8x128xf32>
    %c1_7 = arith.constant 1 : index
    %26 = memref.load %arg3[%c1_7] : memref<50xf32, #tpu.memory_space<smem>>
    %27 = vector.broadcast %26 : f32 to vector<8x128xf32>
    %28 = arith.mulf %25, %27 : vector<8x128xf32>
    %29 = arith.addf %17, %28 : vector<8x128xf32>
    %c2 = arith.constant 2 : index
    %30 = memref.load %arg1[%c2] : memref<50xf32, #tpu.memory_space<smem>>
    %31 = vector.broadcast %30 : f32 to vector<8x128xf32>
    %32 = arith.mulf %4, %31 : vector<8x128xf32>
    %c2_8 = arith.constant 2 : index
    %33 = memref.load %arg2[%c2_8] : memref<50xf32, #tpu.memory_space<smem>>
    %34 = vector.broadcast %33 : f32 to vector<8x128xf32>
    %35 = arith.addf %32, %34 : vector<8x128xf32>
    %cst_9 = arith.constant 0.000000e+00 : f32
    %36 = vector.broadcast %cst_9 : f32 to vector<8x128xf32>
    %37 = arith.maximumf %35, %36 : vector<8x128xf32>
    %c2_10 = arith.constant 2 : index
    %38 = memref.load %arg3[%c2_10] : memref<50xf32, #tpu.memory_space<smem>>
    %39 = vector.broadcast %38 : f32 to vector<8x128xf32>
    %40 = arith.mulf %37, %39 : vector<8x128xf32>
    %41 = arith.addf %29, %40 : vector<8x128xf32>
    %c3 = arith.constant 3 : index
    %42 = memref.load %arg1[%c3] : memref<50xf32, #tpu.memory_space<smem>>
    %43 = vector.broadcast %42 : f32 to vector<8x128xf32>
    %44 = arith.mulf %4, %43 : vector<8x128xf32>
    %c3_11 = arith.constant 3 : index
    %45 = memref.load %arg2[%c3_11] : memref<50xf32, #tpu.memory_space<smem>>
    %46 = vector.broadcast %45 : f32 to vector<8x128xf32>
    %47 = arith.addf %44, %46 : vector<8x128xf32>
    %cst_12 = arith.constant 0.000000e+00 : f32
    %48 = vector.broadcast %cst_12 : f32 to vector<8x128xf32>
    %49 = arith.maximumf %47, %48 : vector<8x128xf32>
    %c3_13 = arith.constant 3 : index
    %50 = memref.load %arg3[%c3_13] : memref<50xf32, #tpu.memory_space<smem>>
    %51 = vector.broadcast %50 : f32 to vector<8x128xf32>
    %52 = arith.mulf %49, %51 : vector<8x128xf32>
    %53 = arith.addf %41, %52 : vector<8x128xf32>
    %c4 = arith.constant 4 : index
    %54 = memref.load %arg1[%c4] : memref<50xf32, #tpu.memory_space<smem>>
    %55 = vector.broadcast %54 : f32 to vector<8x128xf32>
    %56 = arith.mulf %4, %55 : vector<8x128xf32>
    %c4_14 = arith.constant 4 : index
    %57 = memref.load %arg2[%c4_14] : memref<50xf32, #tpu.memory_space<smem>>
    %58 = vector.broadcast %57 : f32 to vector<8x128xf32>
    %59 = arith.addf %56, %58 : vector<8x128xf32>
    %cst_15 = arith.constant 0.000000e+00 : f32
    %60 = vector.broadcast %cst_15 : f32 to vector<8x128xf32>
    %61 = arith.maximumf %59, %60 : vector<8x128xf32>
    %c4_16 = arith.constant 4 : index
    %62 = memref.load %arg3[%c4_16] : memref<50xf32, #tpu.memory_space<smem>>
    %63 = vector.broadcast %62 : f32 to vector<8x128xf32>
    %64 = arith.mulf %61, %63 : vector<8x128xf32>
    %65 = arith.addf %53, %64 : vector<8x128xf32>
    %c5 = arith.constant 5 : index
    %66 = memref.load %arg1[%c5] : memref<50xf32, #tpu.memory_space<smem>>
    %67 = vector.broadcast %66 : f32 to vector<8x128xf32>
    %68 = arith.mulf %4, %67 : vector<8x128xf32>
    %c5_17 = arith.constant 5 : index
    %69 = memref.load %arg2[%c5_17] : memref<50xf32, #tpu.memory_space<smem>>
    %70 = vector.broadcast %69 : f32 to vector<8x128xf32>
    %71 = arith.addf %68, %70 : vector<8x128xf32>
    %cst_18 = arith.constant 0.000000e+00 : f32
    %72 = vector.broadcast %cst_18 : f32 to vector<8x128xf32>
    %73 = arith.maximumf %71, %72 : vector<8x128xf32>
    %c5_19 = arith.constant 5 : index
    %74 = memref.load %arg3[%c5_19] : memref<50xf32, #tpu.memory_space<smem>>
    %75 = vector.broadcast %74 : f32 to vector<8x128xf32>
    %76 = arith.mulf %73, %75 : vector<8x128xf32>
    %77 = arith.addf %65, %76 : vector<8x128xf32>
    %c6 = arith.constant 6 : index
    %78 = memref.load %arg1[%c6] : memref<50xf32, #tpu.memory_space<smem>>
    %79 = vector.broadcast %78 : f32 to vector<8x128xf32>
    %80 = arith.mulf %4, %79 : vector<8x128xf32>
    %c6_20 = arith.constant 6 : index
    %81 = memref.load %arg2[%c6_20] : memref<50xf32, #tpu.memory_space<smem>>
    %82 = vector.broadcast %81 : f32 to vector<8x128xf32>
    %83 = arith.addf %80, %82 : vector<8x128xf32>
    %cst_21 = arith.constant 0.000000e+00 : f32
    %84 = vector.broadcast %cst_21 : f32 to vector<8x128xf32>
    %85 = arith.maximumf %83, %84 : vector<8x128xf32>
    %c6_22 = arith.constant 6 : index
    %86 = memref.load %arg3[%c6_22] : memref<50xf32, #tpu.memory_space<smem>>
    %87 = vector.broadcast %86 : f32 to vector<8x128xf32>
    %88 = arith.mulf %85, %87 : vector<8x128xf32>
    %89 = arith.addf %77, %88 : vector<8x128xf32>
    %c7 = arith.constant 7 : index
    %90 = memref.load %arg1[%c7] : memref<50xf32, #tpu.memory_space<smem>>
    %91 = vector.broadcast %90 : f32 to vector<8x128xf32>
    %92 = arith.mulf %4, %91 : vector<8x128xf32>
    %c7_23 = arith.constant 7 : index
    %93 = memref.load %arg2[%c7_23] : memref<50xf32, #tpu.memory_space<smem>>
    %94 = vector.broadcast %93 : f32 to vector<8x128xf32>
    %95 = arith.addf %92, %94 : vector<8x128xf32>
    %cst_24 = arith.constant 0.000000e+00 : f32
    %96 = vector.broadcast %cst_24 : f32 to vector<8x128xf32>
    %97 = arith.maximumf %95, %96 : vector<8x128xf32>
    %c7_25 = arith.constant 7 : index
    %98 = memref.load %arg3[%c7_25] : memref<50xf32, #tpu.memory_space<smem>>
    %99 = vector.broadcast %98 : f32 to vector<8x128xf32>
    %100 = arith.mulf %97, %99 : vector<8x128xf32>
    %101 = arith.addf %89, %100 : vector<8x128xf32>
    %c8 = arith.constant 8 : index
    %102 = memref.load %arg1[%c8] : memref<50xf32, #tpu.memory_space<smem>>
    %103 = vector.broadcast %102 : f32 to vector<8x128xf32>
    %104 = arith.mulf %4, %103 : vector<8x128xf32>
    %c8_26 = arith.constant 8 : index
    %105 = memref.load %arg2[%c8_26] : memref<50xf32, #tpu.memory_space<smem>>
    %106 = vector.broadcast %105 : f32 to vector<8x128xf32>
    %107 = arith.addf %104, %106 : vector<8x128xf32>
    %cst_27 = arith.constant 0.000000e+00 : f32
    %108 = vector.broadcast %cst_27 : f32 to vector<8x128xf32>
    %109 = arith.maximumf %107, %108 : vector<8x128xf32>
    %c8_28 = arith.constant 8 : index
    %110 = memref.load %arg3[%c8_28] : memref<50xf32, #tpu.memory_space<smem>>
    %111 = vector.broadcast %110 : f32 to vector<8x128xf32>
    %112 = arith.mulf %109, %111 : vector<8x128xf32>
    %113 = arith.addf %101, %112 : vector<8x128xf32>
    %c9 = arith.constant 9 : index
    %114 = memref.load %arg1[%c9] : memref<50xf32, #tpu.memory_space<smem>>
    %115 = vector.broadcast %114 : f32 to vector<8x128xf32>
    %116 = arith.mulf %4, %115 : vector<8x128xf32>
    %c9_29 = arith.constant 9 : index
    %117 = memref.load %arg2[%c9_29] : memref<50xf32, #tpu.memory_space<smem>>
    %118 = vector.broadcast %117 : f32 to vector<8x128xf32>
    %119 = arith.addf %116, %118 : vector<8x128xf32>
    %cst_30 = arith.constant 0.000000e+00 : f32
    %120 = vector.broadcast %cst_30 : f32 to vector<8x128xf32>
    %121 = arith.maximumf %119, %120 : vector<8x128xf32>
    %c9_31 = arith.constant 9 : index
    %122 = memref.load %arg3[%c9_31] : memref<50xf32, #tpu.memory_space<smem>>
    %123 = vector.broadcast %122 : f32 to vector<8x128xf32>
    %124 = arith.mulf %121, %123 : vector<8x128xf32>
    %125 = arith.addf %113, %124 : vector<8x128xf32>
    %c10 = arith.constant 10 : index
    %126 = memref.load %arg1[%c10] : memref<50xf32, #tpu.memory_space<smem>>
    %127 = vector.broadcast %126 : f32 to vector<8x128xf32>
    %128 = arith.mulf %4, %127 : vector<8x128xf32>
    %c10_32 = arith.constant 10 : index
    %129 = memref.load %arg2[%c10_32] : memref<50xf32, #tpu.memory_space<smem>>
    %130 = vector.broadcast %129 : f32 to vector<8x128xf32>
    %131 = arith.addf %128, %130 : vector<8x128xf32>
    %cst_33 = arith.constant 0.000000e+00 : f32
    %132 = vector.broadcast %cst_33 : f32 to vector<8x128xf32>
    %133 = arith.maximumf %131, %132 : vector<8x128xf32>
    %c10_34 = arith.constant 10 : index
    %134 = memref.load %arg3[%c10_34] : memref<50xf32, #tpu.memory_space<smem>>
    %135 = vector.broadcast %134 : f32 to vector<8x128xf32>
    %136 = arith.mulf %133, %135 : vector<8x128xf32>
    %137 = arith.addf %125, %136 : vector<8x128xf32>
    %c11 = arith.constant 11 : index
    %138 = memref.load %arg1[%c11] : memref<50xf32, #tpu.memory_space<smem>>
    %139 = vector.broadcast %138 : f32 to vector<8x128xf32>
    %140 = arith.mulf %4, %139 : vector<8x128xf32>
    %c11_35 = arith.constant 11 : index
    %141 = memref.load %arg2[%c11_35] : memref<50xf32, #tpu.memory_space<smem>>
    %142 = vector.broadcast %141 : f32 to vector<8x128xf32>
    %143 = arith.addf %140, %142 : vector<8x128xf32>
    %cst_36 = arith.constant 0.000000e+00 : f32
    %144 = vector.broadcast %cst_36 : f32 to vector<8x128xf32>
    %145 = arith.maximumf %143, %144 : vector<8x128xf32>
    %c11_37 = arith.constant 11 : index
    %146 = memref.load %arg3[%c11_37] : memref<50xf32, #tpu.memory_space<smem>>
    %147 = vector.broadcast %146 : f32 to vector<8x128xf32>
    %148 = arith.mulf %145, %147 : vector<8x128xf32>
    %149 = arith.addf %137, %148 : vector<8x128xf32>
    %c12 = arith.constant 12 : index
    %150 = memref.load %arg1[%c12] : memref<50xf32, #tpu.memory_space<smem>>
    %151 = vector.broadcast %150 : f32 to vector<8x128xf32>
    %152 = arith.mulf %4, %151 : vector<8x128xf32>
    %c12_38 = arith.constant 12 : index
    %153 = memref.load %arg2[%c12_38] : memref<50xf32, #tpu.memory_space<smem>>
    %154 = vector.broadcast %153 : f32 to vector<8x128xf32>
    %155 = arith.addf %152, %154 : vector<8x128xf32>
    %cst_39 = arith.constant 0.000000e+00 : f32
    %156 = vector.broadcast %cst_39 : f32 to vector<8x128xf32>
    %157 = arith.maximumf %155, %156 : vector<8x128xf32>
    %c12_40 = arith.constant 12 : index
    %158 = memref.load %arg3[%c12_40] : memref<50xf32, #tpu.memory_space<smem>>
    %159 = vector.broadcast %158 : f32 to vector<8x128xf32>
    %160 = arith.mulf %157, %159 : vector<8x128xf32>
    %161 = arith.addf %149, %160 : vector<8x128xf32>
    %c13 = arith.constant 13 : index
    %162 = memref.load %arg1[%c13] : memref<50xf32, #tpu.memory_space<smem>>
    %163 = vector.broadcast %162 : f32 to vector<8x128xf32>
    %164 = arith.mulf %4, %163 : vector<8x128xf32>
    %c13_41 = arith.constant 13 : index
    %165 = memref.load %arg2[%c13_41] : memref<50xf32, #tpu.memory_space<smem>>
    %166 = vector.broadcast %165 : f32 to vector<8x128xf32>
    %167 = arith.addf %164, %166 : vector<8x128xf32>
    %cst_42 = arith.constant 0.000000e+00 : f32
    %168 = vector.broadcast %cst_42 : f32 to vector<8x128xf32>
    %169 = arith.maximumf %167, %168 : vector<8x128xf32>
    %c13_43 = arith.constant 13 : index
    %170 = memref.load %arg3[%c13_43] : memref<50xf32, #tpu.memory_space<smem>>
    %171 = vector.broadcast %170 : f32 to vector<8x128xf32>
    %172 = arith.mulf %169, %171 : vector<8x128xf32>
    %173 = arith.addf %161, %172 : vector<8x128xf32>
    %c14 = arith.constant 14 : index
    %174 = memref.load %arg1[%c14] : memref<50xf32, #tpu.memory_space<smem>>
    %175 = vector.broadcast %174 : f32 to vector<8x128xf32>
    %176 = arith.mulf %4, %175 : vector<8x128xf32>
    %c14_44 = arith.constant 14 : index
    %177 = memref.load %arg2[%c14_44] : memref<50xf32, #tpu.memory_space<smem>>
    %178 = vector.broadcast %177 : f32 to vector<8x128xf32>
    %179 = arith.addf %176, %178 : vector<8x128xf32>
    %cst_45 = arith.constant 0.000000e+00 : f32
    %180 = vector.broadcast %cst_45 : f32 to vector<8x128xf32>
    %181 = arith.maximumf %179, %180 : vector<8x128xf32>
    %c14_46 = arith.constant 14 : index
    %182 = memref.load %arg3[%c14_46] : memref<50xf32, #tpu.memory_space<smem>>
    %183 = vector.broadcast %182 : f32 to vector<8x128xf32>
    %184 = arith.mulf %181, %183 : vector<8x128xf32>
    %185 = arith.addf %173, %184 : vector<8x128xf32>
    %c15 = arith.constant 15 : index
    %186 = memref.load %arg1[%c15] : memref<50xf32, #tpu.memory_space<smem>>
    %187 = vector.broadcast %186 : f32 to vector<8x128xf32>
    %188 = arith.mulf %4, %187 : vector<8x128xf32>
    %c15_47 = arith.constant 15 : index
    %189 = memref.load %arg2[%c15_47] : memref<50xf32, #tpu.memory_space<smem>>
    %190 = vector.broadcast %189 : f32 to vector<8x128xf32>
    %191 = arith.addf %188, %190 : vector<8x128xf32>
    %cst_48 = arith.constant 0.000000e+00 : f32
    %192 = vector.broadcast %cst_48 : f32 to vector<8x128xf32>
    %193 = arith.maximumf %191, %192 : vector<8x128xf32>
    %c15_49 = arith.constant 15 : index
    %194 = memref.load %arg3[%c15_49] : memref<50xf32, #tpu.memory_space<smem>>
    %195 = vector.broadcast %194 : f32 to vector<8x128xf32>
    %196 = arith.mulf %193, %195 : vector<8x128xf32>
    %197 = arith.addf %185, %196 : vector<8x128xf32>
    %c16 = arith.constant 16 : index
    %198 = memref.load %arg1[%c16] : memref<50xf32, #tpu.memory_space<smem>>
    %199 = vector.broadcast %198 : f32 to vector<8x128xf32>
    %200 = arith.mulf %4, %199 : vector<8x128xf32>
    %c16_50 = arith.constant 16 : index
    %201 = memref.load %arg2[%c16_50] : memref<50xf32, #tpu.memory_space<smem>>
    %202 = vector.broadcast %201 : f32 to vector<8x128xf32>
    %203 = arith.addf %200, %202 : vector<8x128xf32>
    %cst_51 = arith.constant 0.000000e+00 : f32
    %204 = vector.broadcast %cst_51 : f32 to vector<8x128xf32>
    %205 = arith.maximumf %203, %204 : vector<8x128xf32>
    %c16_52 = arith.constant 16 : index
    %206 = memref.load %arg3[%c16_52] : memref<50xf32, #tpu.memory_space<smem>>
    %207 = vector.broadcast %206 : f32 to vector<8x128xf32>
    %208 = arith.mulf %205, %207 : vector<8x128xf32>
    %209 = arith.addf %197, %208 : vector<8x128xf32>
    %c17 = arith.constant 17 : index
    %210 = memref.load %arg1[%c17] : memref<50xf32, #tpu.memory_space<smem>>
    %211 = vector.broadcast %210 : f32 to vector<8x128xf32>
    %212 = arith.mulf %4, %211 : vector<8x128xf32>
    %c17_53 = arith.constant 17 : index
    %213 = memref.load %arg2[%c17_53] : memref<50xf32, #tpu.memory_space<smem>>
    %214 = vector.broadcast %213 : f32 to vector<8x128xf32>
    %215 = arith.addf %212, %214 : vector<8x128xf32>
    %cst_54 = arith.constant 0.000000e+00 : f32
    %216 = vector.broadcast %cst_54 : f32 to vector<8x128xf32>
    %217 = arith.maximumf %215, %216 : vector<8x128xf32>
    %c17_55 = arith.constant 17 : index
    %218 = memref.load %arg3[%c17_55] : memref<50xf32, #tpu.memory_space<smem>>
    %219 = vector.broadcast %218 : f32 to vector<8x128xf32>
    %220 = arith.mulf %217, %219 : vector<8x128xf32>
    %221 = arith.addf %209, %220 : vector<8x128xf32>
    %c18 = arith.constant 18 : index
    %222 = memref.load %arg1[%c18] : memref<50xf32, #tpu.memory_space<smem>>
    %223 = vector.broadcast %222 : f32 to vector<8x128xf32>
    %224 = arith.mulf %4, %223 : vector<8x128xf32>
    %c18_56 = arith.constant 18 : index
    %225 = memref.load %arg2[%c18_56] : memref<50xf32, #tpu.memory_space<smem>>
    %226 = vector.broadcast %225 : f32 to vector<8x128xf32>
    %227 = arith.addf %224, %226 : vector<8x128xf32>
    %cst_57 = arith.constant 0.000000e+00 : f32
    %228 = vector.broadcast %cst_57 : f32 to vector<8x128xf32>
    %229 = arith.maximumf %227, %228 : vector<8x128xf32>
    %c18_58 = arith.constant 18 : index
    %230 = memref.load %arg3[%c18_58] : memref<50xf32, #tpu.memory_space<smem>>
    %231 = vector.broadcast %230 : f32 to vector<8x128xf32>
    %232 = arith.mulf %229, %231 : vector<8x128xf32>
    %233 = arith.addf %221, %232 : vector<8x128xf32>
    %c19 = arith.constant 19 : index
    %234 = memref.load %arg1[%c19] : memref<50xf32, #tpu.memory_space<smem>>
    %235 = vector.broadcast %234 : f32 to vector<8x128xf32>
    %236 = arith.mulf %4, %235 : vector<8x128xf32>
    %c19_59 = arith.constant 19 : index
    %237 = memref.load %arg2[%c19_59] : memref<50xf32, #tpu.memory_space<smem>>
    %238 = vector.broadcast %237 : f32 to vector<8x128xf32>
    %239 = arith.addf %236, %238 : vector<8x128xf32>
    %cst_60 = arith.constant 0.000000e+00 : f32
    %240 = vector.broadcast %cst_60 : f32 to vector<8x128xf32>
    %241 = arith.maximumf %239, %240 : vector<8x128xf32>
    %c19_61 = arith.constant 19 : index
    %242 = memref.load %arg3[%c19_61] : memref<50xf32, #tpu.memory_space<smem>>
    %243 = vector.broadcast %242 : f32 to vector<8x128xf32>
    %244 = arith.mulf %241, %243 : vector<8x128xf32>
    %245 = arith.addf %233, %244 : vector<8x128xf32>
    %c20 = arith.constant 20 : index
    %246 = memref.load %arg1[%c20] : memref<50xf32, #tpu.memory_space<smem>>
    %247 = vector.broadcast %246 : f32 to vector<8x128xf32>
    %248 = arith.mulf %4, %247 : vector<8x128xf32>
    %c20_62 = arith.constant 20 : index
    %249 = memref.load %arg2[%c20_62] : memref<50xf32, #tpu.memory_space<smem>>
    %250 = vector.broadcast %249 : f32 to vector<8x128xf32>
    %251 = arith.addf %248, %250 : vector<8x128xf32>
    %cst_63 = arith.constant 0.000000e+00 : f32
    %252 = vector.broadcast %cst_63 : f32 to vector<8x128xf32>
    %253 = arith.maximumf %251, %252 : vector<8x128xf32>
    %c20_64 = arith.constant 20 : index
    %254 = memref.load %arg3[%c20_64] : memref<50xf32, #tpu.memory_space<smem>>
    %255 = vector.broadcast %254 : f32 to vector<8x128xf32>
    %256 = arith.mulf %253, %255 : vector<8x128xf32>
    %257 = arith.addf %245, %256 : vector<8x128xf32>
    %c21 = arith.constant 21 : index
    %258 = memref.load %arg1[%c21] : memref<50xf32, #tpu.memory_space<smem>>
    %259 = vector.broadcast %258 : f32 to vector<8x128xf32>
    %260 = arith.mulf %4, %259 : vector<8x128xf32>
    %c21_65 = arith.constant 21 : index
    %261 = memref.load %arg2[%c21_65] : memref<50xf32, #tpu.memory_space<smem>>
    %262 = vector.broadcast %261 : f32 to vector<8x128xf32>
    %263 = arith.addf %260, %262 : vector<8x128xf32>
    %cst_66 = arith.constant 0.000000e+00 : f32
    %264 = vector.broadcast %cst_66 : f32 to vector<8x128xf32>
    %265 = arith.maximumf %263, %264 : vector<8x128xf32>
    %c21_67 = arith.constant 21 : index
    %266 = memref.load %arg3[%c21_67] : memref<50xf32, #tpu.memory_space<smem>>
    %267 = vector.broadcast %266 : f32 to vector<8x128xf32>
    %268 = arith.mulf %265, %267 : vector<8x128xf32>
    %269 = arith.addf %257, %268 : vector<8x128xf32>
    %c22 = arith.constant 22 : index
    %270 = memref.load %arg1[%c22] : memref<50xf32, #tpu.memory_space<smem>>
    %271 = vector.broadcast %270 : f32 to vector<8x128xf32>
    %272 = arith.mulf %4, %271 : vector<8x128xf32>
    %c22_68 = arith.constant 22 : index
    %273 = memref.load %arg2[%c22_68] : memref<50xf32, #tpu.memory_space<smem>>
    %274 = vector.broadcast %273 : f32 to vector<8x128xf32>
    %275 = arith.addf %272, %274 : vector<8x128xf32>
    %cst_69 = arith.constant 0.000000e+00 : f32
    %276 = vector.broadcast %cst_69 : f32 to vector<8x128xf32>
    %277 = arith.maximumf %275, %276 : vector<8x128xf32>
    %c22_70 = arith.constant 22 : index
    %278 = memref.load %arg3[%c22_70] : memref<50xf32, #tpu.memory_space<smem>>
    %279 = vector.broadcast %278 : f32 to vector<8x128xf32>
    %280 = arith.mulf %277, %279 : vector<8x128xf32>
    %281 = arith.addf %269, %280 : vector<8x128xf32>
    %c23 = arith.constant 23 : index
    %282 = memref.load %arg1[%c23] : memref<50xf32, #tpu.memory_space<smem>>
    %283 = vector.broadcast %282 : f32 to vector<8x128xf32>
    %284 = arith.mulf %4, %283 : vector<8x128xf32>
    %c23_71 = arith.constant 23 : index
    %285 = memref.load %arg2[%c23_71] : memref<50xf32, #tpu.memory_space<smem>>
    %286 = vector.broadcast %285 : f32 to vector<8x128xf32>
    %287 = arith.addf %284, %286 : vector<8x128xf32>
    %cst_72 = arith.constant 0.000000e+00 : f32
    %288 = vector.broadcast %cst_72 : f32 to vector<8x128xf32>
    %289 = arith.maximumf %287, %288 : vector<8x128xf32>
    %c23_73 = arith.constant 23 : index
    %290 = memref.load %arg3[%c23_73] : memref<50xf32, #tpu.memory_space<smem>>
    %291 = vector.broadcast %290 : f32 to vector<8x128xf32>
    %292 = arith.mulf %289, %291 : vector<8x128xf32>
    %293 = arith.addf %281, %292 : vector<8x128xf32>
    %c24 = arith.constant 24 : index
    %294 = memref.load %arg1[%c24] : memref<50xf32, #tpu.memory_space<smem>>
    %295 = vector.broadcast %294 : f32 to vector<8x128xf32>
    %296 = arith.mulf %4, %295 : vector<8x128xf32>
    %c24_74 = arith.constant 24 : index
    %297 = memref.load %arg2[%c24_74] : memref<50xf32, #tpu.memory_space<smem>>
    %298 = vector.broadcast %297 : f32 to vector<8x128xf32>
    %299 = arith.addf %296, %298 : vector<8x128xf32>
    %cst_75 = arith.constant 0.000000e+00 : f32
    %300 = vector.broadcast %cst_75 : f32 to vector<8x128xf32>
    %301 = arith.maximumf %299, %300 : vector<8x128xf32>
    %c24_76 = arith.constant 24 : index
    %302 = memref.load %arg3[%c24_76] : memref<50xf32, #tpu.memory_space<smem>>
    %303 = vector.broadcast %302 : f32 to vector<8x128xf32>
    %304 = arith.mulf %301, %303 : vector<8x128xf32>
    %305 = arith.addf %293, %304 : vector<8x128xf32>
    %c25 = arith.constant 25 : index
    %306 = memref.load %arg1[%c25] : memref<50xf32, #tpu.memory_space<smem>>
    %307 = vector.broadcast %306 : f32 to vector<8x128xf32>
    %308 = arith.mulf %4, %307 : vector<8x128xf32>
    %c25_77 = arith.constant 25 : index
    %309 = memref.load %arg2[%c25_77] : memref<50xf32, #tpu.memory_space<smem>>
    %310 = vector.broadcast %309 : f32 to vector<8x128xf32>
    %311 = arith.addf %308, %310 : vector<8x128xf32>
    %cst_78 = arith.constant 0.000000e+00 : f32
    %312 = vector.broadcast %cst_78 : f32 to vector<8x128xf32>
    %313 = arith.maximumf %311, %312 : vector<8x128xf32>
    %c25_79 = arith.constant 25 : index
    %314 = memref.load %arg3[%c25_79] : memref<50xf32, #tpu.memory_space<smem>>
    %315 = vector.broadcast %314 : f32 to vector<8x128xf32>
    %316 = arith.mulf %313, %315 : vector<8x128xf32>
    %317 = arith.addf %305, %316 : vector<8x128xf32>
    %c26 = arith.constant 26 : index
    %318 = memref.load %arg1[%c26] : memref<50xf32, #tpu.memory_space<smem>>
    %319 = vector.broadcast %318 : f32 to vector<8x128xf32>
    %320 = arith.mulf %4, %319 : vector<8x128xf32>
    %c26_80 = arith.constant 26 : index
    %321 = memref.load %arg2[%c26_80] : memref<50xf32, #tpu.memory_space<smem>>
    %322 = vector.broadcast %321 : f32 to vector<8x128xf32>
    %323 = arith.addf %320, %322 : vector<8x128xf32>
    %cst_81 = arith.constant 0.000000e+00 : f32
    %324 = vector.broadcast %cst_81 : f32 to vector<8x128xf32>
    %325 = arith.maximumf %323, %324 : vector<8x128xf32>
    %c26_82 = arith.constant 26 : index
    %326 = memref.load %arg3[%c26_82] : memref<50xf32, #tpu.memory_space<smem>>
    %327 = vector.broadcast %326 : f32 to vector<8x128xf32>
    %328 = arith.mulf %325, %327 : vector<8x128xf32>
    %329 = arith.addf %317, %328 : vector<8x128xf32>
    %c27 = arith.constant 27 : index
    %330 = memref.load %arg1[%c27] : memref<50xf32, #tpu.memory_space<smem>>
    %331 = vector.broadcast %330 : f32 to vector<8x128xf32>
    %332 = arith.mulf %4, %331 : vector<8x128xf32>
    %c27_83 = arith.constant 27 : index
    %333 = memref.load %arg2[%c27_83] : memref<50xf32, #tpu.memory_space<smem>>
    %334 = vector.broadcast %333 : f32 to vector<8x128xf32>
    %335 = arith.addf %332, %334 : vector<8x128xf32>
    %cst_84 = arith.constant 0.000000e+00 : f32
    %336 = vector.broadcast %cst_84 : f32 to vector<8x128xf32>
    %337 = arith.maximumf %335, %336 : vector<8x128xf32>
    %c27_85 = arith.constant 27 : index
    %338 = memref.load %arg3[%c27_85] : memref<50xf32, #tpu.memory_space<smem>>
    %339 = vector.broadcast %338 : f32 to vector<8x128xf32>
    %340 = arith.mulf %337, %339 : vector<8x128xf32>
    %341 = arith.addf %329, %340 : vector<8x128xf32>
    %c28 = arith.constant 28 : index
    %342 = memref.load %arg1[%c28] : memref<50xf32, #tpu.memory_space<smem>>
    %343 = vector.broadcast %342 : f32 to vector<8x128xf32>
    %344 = arith.mulf %4, %343 : vector<8x128xf32>
    %c28_86 = arith.constant 28 : index
    %345 = memref.load %arg2[%c28_86] : memref<50xf32, #tpu.memory_space<smem>>
    %346 = vector.broadcast %345 : f32 to vector<8x128xf32>
    %347 = arith.addf %344, %346 : vector<8x128xf32>
    %cst_87 = arith.constant 0.000000e+00 : f32
    %348 = vector.broadcast %cst_87 : f32 to vector<8x128xf32>
    %349 = arith.maximumf %347, %348 : vector<8x128xf32>
    %c28_88 = arith.constant 28 : index
    %350 = memref.load %arg3[%c28_88] : memref<50xf32, #tpu.memory_space<smem>>
    %351 = vector.broadcast %350 : f32 to vector<8x128xf32>
    %352 = arith.mulf %349, %351 : vector<8x128xf32>
    %353 = arith.addf %341, %352 : vector<8x128xf32>
    %c29 = arith.constant 29 : index
    %354 = memref.load %arg1[%c29] : memref<50xf32, #tpu.memory_space<smem>>
    %355 = vector.broadcast %354 : f32 to vector<8x128xf32>
    %356 = arith.mulf %4, %355 : vector<8x128xf32>
    %c29_89 = arith.constant 29 : index
    %357 = memref.load %arg2[%c29_89] : memref<50xf32, #tpu.memory_space<smem>>
    %358 = vector.broadcast %357 : f32 to vector<8x128xf32>
    %359 = arith.addf %356, %358 : vector<8x128xf32>
    %cst_90 = arith.constant 0.000000e+00 : f32
    %360 = vector.broadcast %cst_90 : f32 to vector<8x128xf32>
    %361 = arith.maximumf %359, %360 : vector<8x128xf32>
    %c29_91 = arith.constant 29 : index
    %362 = memref.load %arg3[%c29_91] : memref<50xf32, #tpu.memory_space<smem>>
    %363 = vector.broadcast %362 : f32 to vector<8x128xf32>
    %364 = arith.mulf %361, %363 : vector<8x128xf32>
    %365 = arith.addf %353, %364 : vector<8x128xf32>
    %c30 = arith.constant 30 : index
    %366 = memref.load %arg1[%c30] : memref<50xf32, #tpu.memory_space<smem>>
    %367 = vector.broadcast %366 : f32 to vector<8x128xf32>
    %368 = arith.mulf %4, %367 : vector<8x128xf32>
    %c30_92 = arith.constant 30 : index
    %369 = memref.load %arg2[%c30_92] : memref<50xf32, #tpu.memory_space<smem>>
    %370 = vector.broadcast %369 : f32 to vector<8x128xf32>
    %371 = arith.addf %368, %370 : vector<8x128xf32>
    %cst_93 = arith.constant 0.000000e+00 : f32
    %372 = vector.broadcast %cst_93 : f32 to vector<8x128xf32>
    %373 = arith.maximumf %371, %372 : vector<8x128xf32>
    %c30_94 = arith.constant 30 : index
    %374 = memref.load %arg3[%c30_94] : memref<50xf32, #tpu.memory_space<smem>>
    %375 = vector.broadcast %374 : f32 to vector<8x128xf32>
    %376 = arith.mulf %373, %375 : vector<8x128xf32>
    %377 = arith.addf %365, %376 : vector<8x128xf32>
    %c31 = arith.constant 31 : index
    %378 = memref.load %arg1[%c31] : memref<50xf32, #tpu.memory_space<smem>>
    %379 = vector.broadcast %378 : f32 to vector<8x128xf32>
    %380 = arith.mulf %4, %379 : vector<8x128xf32>
    %c31_95 = arith.constant 31 : index
    %381 = memref.load %arg2[%c31_95] : memref<50xf32, #tpu.memory_space<smem>>
    %382 = vector.broadcast %381 : f32 to vector<8x128xf32>
    %383 = arith.addf %380, %382 : vector<8x128xf32>
    %cst_96 = arith.constant 0.000000e+00 : f32
    %384 = vector.broadcast %cst_96 : f32 to vector<8x128xf32>
    %385 = arith.maximumf %383, %384 : vector<8x128xf32>
    %c31_97 = arith.constant 31 : index
    %386 = memref.load %arg3[%c31_97] : memref<50xf32, #tpu.memory_space<smem>>
    %387 = vector.broadcast %386 : f32 to vector<8x128xf32>
    %388 = arith.mulf %385, %387 : vector<8x128xf32>
    %389 = arith.addf %377, %388 : vector<8x128xf32>
    %c32 = arith.constant 32 : index
    %390 = memref.load %arg1[%c32] : memref<50xf32, #tpu.memory_space<smem>>
    %391 = vector.broadcast %390 : f32 to vector<8x128xf32>
    %392 = arith.mulf %4, %391 : vector<8x128xf32>
    %c32_98 = arith.constant 32 : index
    %393 = memref.load %arg2[%c32_98] : memref<50xf32, #tpu.memory_space<smem>>
    %394 = vector.broadcast %393 : f32 to vector<8x128xf32>
    %395 = arith.addf %392, %394 : vector<8x128xf32>
    %cst_99 = arith.constant 0.000000e+00 : f32
    %396 = vector.broadcast %cst_99 : f32 to vector<8x128xf32>
    %397 = arith.maximumf %395, %396 : vector<8x128xf32>
    %c32_100 = arith.constant 32 : index
    %398 = memref.load %arg3[%c32_100] : memref<50xf32, #tpu.memory_space<smem>>
    %399 = vector.broadcast %398 : f32 to vector<8x128xf32>
    %400 = arith.mulf %397, %399 : vector<8x128xf32>
    %401 = arith.addf %389, %400 : vector<8x128xf32>
    %c33 = arith.constant 33 : index
    %402 = memref.load %arg1[%c33] : memref<50xf32, #tpu.memory_space<smem>>
    %403 = vector.broadcast %402 : f32 to vector<8x128xf32>
    %404 = arith.mulf %4, %403 : vector<8x128xf32>
    %c33_101 = arith.constant 33 : index
    %405 = memref.load %arg2[%c33_101] : memref<50xf32, #tpu.memory_space<smem>>
    %406 = vector.broadcast %405 : f32 to vector<8x128xf32>
    %407 = arith.addf %404, %406 : vector<8x128xf32>
    %cst_102 = arith.constant 0.000000e+00 : f32
    %408 = vector.broadcast %cst_102 : f32 to vector<8x128xf32>
    %409 = arith.maximumf %407, %408 : vector<8x128xf32>
    %c33_103 = arith.constant 33 : index
    %410 = memref.load %arg3[%c33_103] : memref<50xf32, #tpu.memory_space<smem>>
    %411 = vector.broadcast %410 : f32 to vector<8x128xf32>
    %412 = arith.mulf %409, %411 : vector<8x128xf32>
    %413 = arith.addf %401, %412 : vector<8x128xf32>
    %c34 = arith.constant 34 : index
    %414 = memref.load %arg1[%c34] : memref<50xf32, #tpu.memory_space<smem>>
    %415 = vector.broadcast %414 : f32 to vector<8x128xf32>
    %416 = arith.mulf %4, %415 : vector<8x128xf32>
    %c34_104 = arith.constant 34 : index
    %417 = memref.load %arg2[%c34_104] : memref<50xf32, #tpu.memory_space<smem>>
    %418 = vector.broadcast %417 : f32 to vector<8x128xf32>
    %419 = arith.addf %416, %418 : vector<8x128xf32>
    %cst_105 = arith.constant 0.000000e+00 : f32
    %420 = vector.broadcast %cst_105 : f32 to vector<8x128xf32>
    %421 = arith.maximumf %419, %420 : vector<8x128xf32>
    %c34_106 = arith.constant 34 : index
    %422 = memref.load %arg3[%c34_106] : memref<50xf32, #tpu.memory_space<smem>>
    %423 = vector.broadcast %422 : f32 to vector<8x128xf32>
    %424 = arith.mulf %421, %423 : vector<8x128xf32>
    %425 = arith.addf %413, %424 : vector<8x128xf32>
    %c35 = arith.constant 35 : index
    %426 = memref.load %arg1[%c35] : memref<50xf32, #tpu.memory_space<smem>>
    %427 = vector.broadcast %426 : f32 to vector<8x128xf32>
    %428 = arith.mulf %4, %427 : vector<8x128xf32>
    %c35_107 = arith.constant 35 : index
    %429 = memref.load %arg2[%c35_107] : memref<50xf32, #tpu.memory_space<smem>>
    %430 = vector.broadcast %429 : f32 to vector<8x128xf32>
    %431 = arith.addf %428, %430 : vector<8x128xf32>
    %cst_108 = arith.constant 0.000000e+00 : f32
    %432 = vector.broadcast %cst_108 : f32 to vector<8x128xf32>
    %433 = arith.maximumf %431, %432 : vector<8x128xf32>
    %c35_109 = arith.constant 35 : index
    %434 = memref.load %arg3[%c35_109] : memref<50xf32, #tpu.memory_space<smem>>
    %435 = vector.broadcast %434 : f32 to vector<8x128xf32>
    %436 = arith.mulf %433, %435 : vector<8x128xf32>
    %437 = arith.addf %425, %436 : vector<8x128xf32>
    %c36 = arith.constant 36 : index
    %438 = memref.load %arg1[%c36] : memref<50xf32, #tpu.memory_space<smem>>
    %439 = vector.broadcast %438 : f32 to vector<8x128xf32>
    %440 = arith.mulf %4, %439 : vector<8x128xf32>
    %c36_110 = arith.constant 36 : index
    %441 = memref.load %arg2[%c36_110] : memref<50xf32, #tpu.memory_space<smem>>
    %442 = vector.broadcast %441 : f32 to vector<8x128xf32>
    %443 = arith.addf %440, %442 : vector<8x128xf32>
    %cst_111 = arith.constant 0.000000e+00 : f32
    %444 = vector.broadcast %cst_111 : f32 to vector<8x128xf32>
    %445 = arith.maximumf %443, %444 : vector<8x128xf32>
    %c36_112 = arith.constant 36 : index
    %446 = memref.load %arg3[%c36_112] : memref<50xf32, #tpu.memory_space<smem>>
    %447 = vector.broadcast %446 : f32 to vector<8x128xf32>
    %448 = arith.mulf %445, %447 : vector<8x128xf32>
    %449 = arith.addf %437, %448 : vector<8x128xf32>
    %c37 = arith.constant 37 : index
    %450 = memref.load %arg1[%c37] : memref<50xf32, #tpu.memory_space<smem>>
    %451 = vector.broadcast %450 : f32 to vector<8x128xf32>
    %452 = arith.mulf %4, %451 : vector<8x128xf32>
    %c37_113 = arith.constant 37 : index
    %453 = memref.load %arg2[%c37_113] : memref<50xf32, #tpu.memory_space<smem>>
    %454 = vector.broadcast %453 : f32 to vector<8x128xf32>
    %455 = arith.addf %452, %454 : vector<8x128xf32>
    %cst_114 = arith.constant 0.000000e+00 : f32
    %456 = vector.broadcast %cst_114 : f32 to vector<8x128xf32>
    %457 = arith.maximumf %455, %456 : vector<8x128xf32>
    %c37_115 = arith.constant 37 : index
    %458 = memref.load %arg3[%c37_115] : memref<50xf32, #tpu.memory_space<smem>>
    %459 = vector.broadcast %458 : f32 to vector<8x128xf32>
    %460 = arith.mulf %457, %459 : vector<8x128xf32>
    %461 = arith.addf %449, %460 : vector<8x128xf32>
    %c38 = arith.constant 38 : index
    %462 = memref.load %arg1[%c38] : memref<50xf32, #tpu.memory_space<smem>>
    %463 = vector.broadcast %462 : f32 to vector<8x128xf32>
    %464 = arith.mulf %4, %463 : vector<8x128xf32>
    %c38_116 = arith.constant 38 : index
    %465 = memref.load %arg2[%c38_116] : memref<50xf32, #tpu.memory_space<smem>>
    %466 = vector.broadcast %465 : f32 to vector<8x128xf32>
    %467 = arith.addf %464, %466 : vector<8x128xf32>
    %cst_117 = arith.constant 0.000000e+00 : f32
    %468 = vector.broadcast %cst_117 : f32 to vector<8x128xf32>
    %469 = arith.maximumf %467, %468 : vector<8x128xf32>
    %c38_118 = arith.constant 38 : index
    %470 = memref.load %arg3[%c38_118] : memref<50xf32, #tpu.memory_space<smem>>
    %471 = vector.broadcast %470 : f32 to vector<8x128xf32>
    %472 = arith.mulf %469, %471 : vector<8x128xf32>
    %473 = arith.addf %461, %472 : vector<8x128xf32>
    %c39 = arith.constant 39 : index
    %474 = memref.load %arg1[%c39] : memref<50xf32, #tpu.memory_space<smem>>
    %475 = vector.broadcast %474 : f32 to vector<8x128xf32>
    %476 = arith.mulf %4, %475 : vector<8x128xf32>
    %c39_119 = arith.constant 39 : index
    %477 = memref.load %arg2[%c39_119] : memref<50xf32, #tpu.memory_space<smem>>
    %478 = vector.broadcast %477 : f32 to vector<8x128xf32>
    %479 = arith.addf %476, %478 : vector<8x128xf32>
    %cst_120 = arith.constant 0.000000e+00 : f32
    %480 = vector.broadcast %cst_120 : f32 to vector<8x128xf32>
    %481 = arith.maximumf %479, %480 : vector<8x128xf32>
    %c39_121 = arith.constant 39 : index
    %482 = memref.load %arg3[%c39_121] : memref<50xf32, #tpu.memory_space<smem>>
    %483 = vector.broadcast %482 : f32 to vector<8x128xf32>
    %484 = arith.mulf %481, %483 : vector<8x128xf32>
    %485 = arith.addf %473, %484 : vector<8x128xf32>
    %c40 = arith.constant 40 : index
    %486 = memref.load %arg1[%c40] : memref<50xf32, #tpu.memory_space<smem>>
    %487 = vector.broadcast %486 : f32 to vector<8x128xf32>
    %488 = arith.mulf %4, %487 : vector<8x128xf32>
    %c40_122 = arith.constant 40 : index
    %489 = memref.load %arg2[%c40_122] : memref<50xf32, #tpu.memory_space<smem>>
    %490 = vector.broadcast %489 : f32 to vector<8x128xf32>
    %491 = arith.addf %488, %490 : vector<8x128xf32>
    %cst_123 = arith.constant 0.000000e+00 : f32
    %492 = vector.broadcast %cst_123 : f32 to vector<8x128xf32>
    %493 = arith.maximumf %491, %492 : vector<8x128xf32>
    %c40_124 = arith.constant 40 : index
    %494 = memref.load %arg3[%c40_124] : memref<50xf32, #tpu.memory_space<smem>>
    %495 = vector.broadcast %494 : f32 to vector<8x128xf32>
    %496 = arith.mulf %493, %495 : vector<8x128xf32>
    %497 = arith.addf %485, %496 : vector<8x128xf32>
    %c41 = arith.constant 41 : index
    %498 = memref.load %arg1[%c41] : memref<50xf32, #tpu.memory_space<smem>>
    %499 = vector.broadcast %498 : f32 to vector<8x128xf32>
    %500 = arith.mulf %4, %499 : vector<8x128xf32>
    %c41_125 = arith.constant 41 : index
    %501 = memref.load %arg2[%c41_125] : memref<50xf32, #tpu.memory_space<smem>>
    %502 = vector.broadcast %501 : f32 to vector<8x128xf32>
    %503 = arith.addf %500, %502 : vector<8x128xf32>
    %cst_126 = arith.constant 0.000000e+00 : f32
    %504 = vector.broadcast %cst_126 : f32 to vector<8x128xf32>
    %505 = arith.maximumf %503, %504 : vector<8x128xf32>
    %c41_127 = arith.constant 41 : index
    %506 = memref.load %arg3[%c41_127] : memref<50xf32, #tpu.memory_space<smem>>
    %507 = vector.broadcast %506 : f32 to vector<8x128xf32>
    %508 = arith.mulf %505, %507 : vector<8x128xf32>
    %509 = arith.addf %497, %508 : vector<8x128xf32>
    %c42 = arith.constant 42 : index
    %510 = memref.load %arg1[%c42] : memref<50xf32, #tpu.memory_space<smem>>
    %511 = vector.broadcast %510 : f32 to vector<8x128xf32>
    %512 = arith.mulf %4, %511 : vector<8x128xf32>
    %c42_128 = arith.constant 42 : index
    %513 = memref.load %arg2[%c42_128] : memref<50xf32, #tpu.memory_space<smem>>
    %514 = vector.broadcast %513 : f32 to vector<8x128xf32>
    %515 = arith.addf %512, %514 : vector<8x128xf32>
    %cst_129 = arith.constant 0.000000e+00 : f32
    %516 = vector.broadcast %cst_129 : f32 to vector<8x128xf32>
    %517 = arith.maximumf %515, %516 : vector<8x128xf32>
    %c42_130 = arith.constant 42 : index
    %518 = memref.load %arg3[%c42_130] : memref<50xf32, #tpu.memory_space<smem>>
    %519 = vector.broadcast %518 : f32 to vector<8x128xf32>
    %520 = arith.mulf %517, %519 : vector<8x128xf32>
    %521 = arith.addf %509, %520 : vector<8x128xf32>
    %c43 = arith.constant 43 : index
    %522 = memref.load %arg1[%c43] : memref<50xf32, #tpu.memory_space<smem>>
    %523 = vector.broadcast %522 : f32 to vector<8x128xf32>
    %524 = arith.mulf %4, %523 : vector<8x128xf32>
    %c43_131 = arith.constant 43 : index
    %525 = memref.load %arg2[%c43_131] : memref<50xf32, #tpu.memory_space<smem>>
    %526 = vector.broadcast %525 : f32 to vector<8x128xf32>
    %527 = arith.addf %524, %526 : vector<8x128xf32>
    %cst_132 = arith.constant 0.000000e+00 : f32
    %528 = vector.broadcast %cst_132 : f32 to vector<8x128xf32>
    %529 = arith.maximumf %527, %528 : vector<8x128xf32>
    %c43_133 = arith.constant 43 : index
    %530 = memref.load %arg3[%c43_133] : memref<50xf32, #tpu.memory_space<smem>>
    %531 = vector.broadcast %530 : f32 to vector<8x128xf32>
    %532 = arith.mulf %529, %531 : vector<8x128xf32>
    %533 = arith.addf %521, %532 : vector<8x128xf32>
    %c44 = arith.constant 44 : index
    %534 = memref.load %arg1[%c44] : memref<50xf32, #tpu.memory_space<smem>>
    %535 = vector.broadcast %534 : f32 to vector<8x128xf32>
    %536 = arith.mulf %4, %535 : vector<8x128xf32>
    %c44_134 = arith.constant 44 : index
    %537 = memref.load %arg2[%c44_134] : memref<50xf32, #tpu.memory_space<smem>>
    %538 = vector.broadcast %537 : f32 to vector<8x128xf32>
    %539 = arith.addf %536, %538 : vector<8x128xf32>
    %cst_135 = arith.constant 0.000000e+00 : f32
    %540 = vector.broadcast %cst_135 : f32 to vector<8x128xf32>
    %541 = arith.maximumf %539, %540 : vector<8x128xf32>
    %c44_136 = arith.constant 44 : index
    %542 = memref.load %arg3[%c44_136] : memref<50xf32, #tpu.memory_space<smem>>
    %543 = vector.broadcast %542 : f32 to vector<8x128xf32>
    %544 = arith.mulf %541, %543 : vector<8x128xf32>
    %545 = arith.addf %533, %544 : vector<8x128xf32>
    %c45 = arith.constant 45 : index
    %546 = memref.load %arg1[%c45] : memref<50xf32, #tpu.memory_space<smem>>
    %547 = vector.broadcast %546 : f32 to vector<8x128xf32>
    %548 = arith.mulf %4, %547 : vector<8x128xf32>
    %c45_137 = arith.constant 45 : index
    %549 = memref.load %arg2[%c45_137] : memref<50xf32, #tpu.memory_space<smem>>
    %550 = vector.broadcast %549 : f32 to vector<8x128xf32>
    %551 = arith.addf %548, %550 : vector<8x128xf32>
    %cst_138 = arith.constant 0.000000e+00 : f32
    %552 = vector.broadcast %cst_138 : f32 to vector<8x128xf32>
    %553 = arith.maximumf %551, %552 : vector<8x128xf32>
    %c45_139 = arith.constant 45 : index
    %554 = memref.load %arg3[%c45_139] : memref<50xf32, #tpu.memory_space<smem>>
    %555 = vector.broadcast %554 : f32 to vector<8x128xf32>
    %556 = arith.mulf %553, %555 : vector<8x128xf32>
    %557 = arith.addf %545, %556 : vector<8x128xf32>
    %c46 = arith.constant 46 : index
    %558 = memref.load %arg1[%c46] : memref<50xf32, #tpu.memory_space<smem>>
    %559 = vector.broadcast %558 : f32 to vector<8x128xf32>
    %560 = arith.mulf %4, %559 : vector<8x128xf32>
    %c46_140 = arith.constant 46 : index
    %561 = memref.load %arg2[%c46_140] : memref<50xf32, #tpu.memory_space<smem>>
    %562 = vector.broadcast %561 : f32 to vector<8x128xf32>
    %563 = arith.addf %560, %562 : vector<8x128xf32>
    %cst_141 = arith.constant 0.000000e+00 : f32
    %564 = vector.broadcast %cst_141 : f32 to vector<8x128xf32>
    %565 = arith.maximumf %563, %564 : vector<8x128xf32>
    %c46_142 = arith.constant 46 : index
    %566 = memref.load %arg3[%c46_142] : memref<50xf32, #tpu.memory_space<smem>>
    %567 = vector.broadcast %566 : f32 to vector<8x128xf32>
    %568 = arith.mulf %565, %567 : vector<8x128xf32>
    %569 = arith.addf %557, %568 : vector<8x128xf32>
    %c47 = arith.constant 47 : index
    %570 = memref.load %arg1[%c47] : memref<50xf32, #tpu.memory_space<smem>>
    %571 = vector.broadcast %570 : f32 to vector<8x128xf32>
    %572 = arith.mulf %4, %571 : vector<8x128xf32>
    %c47_143 = arith.constant 47 : index
    %573 = memref.load %arg2[%c47_143] : memref<50xf32, #tpu.memory_space<smem>>
    %574 = vector.broadcast %573 : f32 to vector<8x128xf32>
    %575 = arith.addf %572, %574 : vector<8x128xf32>
    %cst_144 = arith.constant 0.000000e+00 : f32
    %576 = vector.broadcast %cst_144 : f32 to vector<8x128xf32>
    %577 = arith.maximumf %575, %576 : vector<8x128xf32>
    %c47_145 = arith.constant 47 : index
    %578 = memref.load %arg3[%c47_145] : memref<50xf32, #tpu.memory_space<smem>>
    %579 = vector.broadcast %578 : f32 to vector<8x128xf32>
    %580 = arith.mulf %577, %579 : vector<8x128xf32>
    %581 = arith.addf %569, %580 : vector<8x128xf32>
    %c48 = arith.constant 48 : index
    %582 = memref.load %arg1[%c48] : memref<50xf32, #tpu.memory_space<smem>>
    %583 = vector.broadcast %582 : f32 to vector<8x128xf32>
    %584 = arith.mulf %4, %583 : vector<8x128xf32>
    %c48_146 = arith.constant 48 : index
    %585 = memref.load %arg2[%c48_146] : memref<50xf32, #tpu.memory_space<smem>>
    %586 = vector.broadcast %585 : f32 to vector<8x128xf32>
    %587 = arith.addf %584, %586 : vector<8x128xf32>
    %cst_147 = arith.constant 0.000000e+00 : f32
    %588 = vector.broadcast %cst_147 : f32 to vector<8x128xf32>
    %589 = arith.maximumf %587, %588 : vector<8x128xf32>
    %c48_148 = arith.constant 48 : index
    %590 = memref.load %arg3[%c48_148] : memref<50xf32, #tpu.memory_space<smem>>
    %591 = vector.broadcast %590 : f32 to vector<8x128xf32>
    %592 = arith.mulf %589, %591 : vector<8x128xf32>
    %593 = arith.addf %581, %592 : vector<8x128xf32>
    %c49 = arith.constant 49 : index
    %594 = memref.load %arg1[%c49] : memref<50xf32, #tpu.memory_space<smem>>
    %595 = vector.broadcast %594 : f32 to vector<8x128xf32>
    %596 = arith.mulf %4, %595 : vector<8x128xf32>
    %c49_149 = arith.constant 49 : index
    %597 = memref.load %arg2[%c49_149] : memref<50xf32, #tpu.memory_space<smem>>
    %598 = vector.broadcast %597 : f32 to vector<8x128xf32>
    %599 = arith.addf %596, %598 : vector<8x128xf32>
    %cst_150 = arith.constant 0.000000e+00 : f32
    %600 = vector.broadcast %cst_150 : f32 to vector<8x128xf32>
    %601 = arith.maximumf %599, %600 : vector<8x128xf32>
    %c49_151 = arith.constant 49 : index
    %602 = memref.load %arg3[%c49_151] : memref<50xf32, #tpu.memory_space<smem>>
    %603 = vector.broadcast %602 : f32 to vector<8x128xf32>
    %604 = arith.mulf %601, %603 : vector<8x128xf32>
    %605 = arith.addf %593, %604 : vector<8x128xf32>
    %606 = vector.broadcast %0 : f32 to vector<8x128xf32>
    %607 = arith.addf %605, %606 : vector<8x128xf32>
    %cst_152 = arith.constant 5.000000e-01 : f32
    %608 = vector.broadcast %cst_152 : f32 to vector<8x128xf32>
    %609 = arith.mulf %608, %607 : vector<8x128xf32>
    %610 = math.tanh %609 : vector<8x128xf32>
    %cst_153 = arith.constant 5.000000e-01 : f32
    %611 = vector.broadcast %cst_153 : f32 to vector<8x128xf32>
    %612 = arith.mulf %611, %610 : vector<8x128xf32>
    %cst_154 = arith.constant 5.000000e-01 : f32
    %613 = vector.broadcast %cst_154 : f32 to vector<8x128xf32>
    %614 = arith.addf %612, %613 : vector<8x128xf32>
    %615 = arith.index_cast %2 : i32 to index
    %c0_155 = arith.constant 0 : index
    %616 = vector.load %arg6[%615, %c0_155] : memref<8x128xf32, #tpu.memory_space<vmem>>, vector<8x128xf32>
    tpu.vector_store %arg6[%615, %c0_155], %614 {strides = array<i32>} : memref<8x128xf32, #tpu.memory_space<vmem>>, vector<8x128xf32>,
    %c1_i32 = arith.constant 1 : i32
    return
  }
  func.func @transform_0(%arg0: i32) -> i32 {
    %c0_i32 = arith.constant 0 : i32
    %c0_i32_0 = arith.constant 0 : i32
    return %c0_i32 : i32
  }
  func.func @transform_1(%arg0: i32) -> i32 {
    %c0_i32 = arith.constant 0 : i32
    %c0_i32_0 = arith.constant 0 : i32
    return %c0_i32 : i32
  }
  func.func @transform_2(%arg0: i32) -> i32 {
    %c0_i32 = arith.constant 0 : i32
    %c0_i32_0 = arith.constant 0 : i32
    return %c0_i32 : i32
  }
  func.func @transform_3(%arg0: i32) -> i32 {
    %c0_i32 = arith.constant 0 : i32
    %c0_i32_0 = arith.constant 0 : i32
    return %c0_i32 : i32
  }
  func.func @transform_4(%arg0: i32) -> (i32, i32) {
    %c0_i32 = arith.constant 0 : i32
    %c0_i32_0 = arith.constant 0 : i32
    return %arg0, %c0_i32 : i32, i32
  }
  func.func @transform_5(%arg0: i32) -> (i32, i32) {
    %c0_i32 = arith.constant 0 : i32
    %c0_i32_0 = arith.constant 0 : i32
    return %arg0, %c0_i32 : i32, i32
  }
}

</mosaic_0001>

<llo_original>
// kernel: tpu_custom_call.1
$region0: #{tpu_custom_call.1}
  #allocation0 [shape = 'u32[]', space=smem, size = 0x4, offset = 0x4, fixed_abs, tag = 'smem constant byte address 0x4 - core index']
  #allocation1 [shape = 'u32[144,128]{1,0:T(1,128)}', space=vmem, size = 0x12000, scoped, tag = 'internal scratch']
  #allocation2 [shape = 'f32[1]{0:T(128)S(6)}', space=smem, size = 0x200, scoped, tag = 'scoped memory for tpu_custom_call.1']
  %s0 = inlined_call_operand.vmem [shape: f32[50], index: 0, kind: input, shape index: {}]
  %s1 = inlined_call_operand.vmem [shape: f32[50], index: 1, kind: input, shape index: {}]
  %s2 = inlined_call_operand.vmem [shape: f32[50], index: 2, kind: input, shape index: {}]
  %s3 = inlined_call_operand.<no memory space> [shape: f32[1], index: 3, kind: input, shape index: {}]
  %s4 = inlined_call_operand.vmem [shape: f32[8,128], index: 4, kind: input, shape index: {}]
  %s5 = inlined_call_operand.hbm [shape: f32[8,128], index: 5, kind: output, shape index: {}]
  %s6 = sld [smem:[#allocation0]]
  $region42: #{tpu_custom_call.1} parent=0
    _
  %s8 = ssub.s32 1, %s6
  %s9 = scalar_select 0, %s8, %s6
  %10 = sst [smem:[#allocation2]] %s3
  $region1: #{tpu_custom_call.1} parent=0
    #allocation3 [shape = 'u8[512]{0}', space=smem, size = 0x200, scoped, tag = 'input window, operand 0, single buffered']
    #allocation4 [shape = 's32[1]{0}', space=sflag, size = 0x4, scoped, tag = 'scoped memory for tpu_custom_call.1']
    #allocation5 [shape = 's32[1]{0}', space=sflag, size = 0x4, scoped, tag = 'scoped memory for tpu_custom_call.1']
    #allocation6 [shape = 'u8[512]{0}', space=smem, size = 0x200, scoped, tag = 'input window, operand 1, single buffered']
    #allocation7 [shape = 's32[1]{0}', space=sflag, size = 0x4, scoped, tag = 'scoped memory for tpu_custom_call.1']
    #allocation8 [shape = 'u8[512]{0}', space=smem, size = 0x200, scoped, tag = 'input window, operand 2, single buffered']
    #allocation9 [shape = 'u8[4096]{0}', space=vmem, size = 0x1000, scoped, tag = 'output window, operand 0, single buffered']
    %11 = vsyncpa [#allocation5], 0
    %12 = vsyncpa [#allocation7], 0
    %13 = vsyncpa [#allocation4], 0
    // Predicated region
    $region2: #{tpu_custom_call.1} parent=1 // pred_check
      _
    $region3: #{tpu_custom_call.1} parent=1 // pred_check_branch
      %15 = sbr.rel (0) target = $region5
    $region4: #{tpu_custom_call.1} parent=1 // pred_region
      %s17 = ssub.s32 16, 16
      %18 = vsyncadd [#allocation5], %s17
      %s20 = sshll.u32 %s0, 4
      %s21 = int_to_ptr.vmem [resolvable:$true] %s20
      %23 = dma.vmem_to_smem %s21, 16, [#allocation3], [#allocation5]
    $region5: #{tpu_custom_call.1} parent=1 // pred_fallthru
      _
    // Predicated region
    $region6: #{tpu_custom_call.1} parent=1 // pred_check
      _
    $region7: #{tpu_custom_call.1} parent=1 // pred_check_branch
      %25 = sbr.rel (0) target = $region9
    $region8: #{tpu_custom_call.1} parent=1 // pred_region
      %s27 = ssub.s32 16, 16
      %28 = vsyncadd [#allocation7], %s27
      %s30 = sshll.u32 %s1, 4
      %s31 = int_to_ptr.vmem [resolvable:$true] %s30
      %33 = dma.vmem_to_smem %s31, 16, [#allocation6], [#allocation7]
    $region9: #{tpu_custom_call.1} parent=1 // pred_fallthru
      _
    // Predicated region
    $region10: #{tpu_custom_call.1} parent=1 // pred_check
      _
    $region11: #{tpu_custom_call.1} parent=1 // pred_check_branch
      %35 = sbr.rel (0) target = $region13
    $region12: #{tpu_custom_call.1} parent=1 // pred_region
      %s37 = ssub.s32 16, 16
      %38 = vsyncadd [#allocation7], %s37
      %s40 = sshll.u32 %s2, 4
      %s41 = int_to_ptr.vmem [resolvable:$true] %s40
      %43 = dma.vmem_to_smem %s41, 16, [#allocation8], [#allocation7]
    $region13: #{tpu_custom_call.1} parent=1 // pred_fallthru
      _
    // Predicated region
    $region14: #{tpu_custom_call.1} parent=1 // pred_check
      _
    $region15: #{tpu_custom_call.1} parent=1 // pred_check_branch
      %45 = sbr.rel (0) target = $region17
    $region16: #{tpu_custom_call.1} parent=1 // pred_region
      _
    $region17: #{tpu_custom_call.1} parent=1 // pred_fallthru
      _
    // Predicated region
    $region18: #{tpu_custom_call.1} parent=1 // pred_check
      _
    $region19: #{tpu_custom_call.1} parent=1 // pred_check_branch
      %47 = sbr.rel (0) target = $region21
    $region20: #{tpu_custom_call.1} parent=1 // pred_region
      _
    $region21: #{tpu_custom_call.1} parent=1 // pred_fallthru
      _
    // Predicated region
    $region22: #{tpu_custom_call.1} parent=1 // pred_check
      _
    $region23: #{tpu_custom_call.1} parent=1 // pred_check_branch
      %49 = sbr.rel (0) target = $region25
    $region24: #{tpu_custom_call.1} parent=1 // pred_region
      %50 = dma.done [#allocation5], 16
    $region25: #{tpu_custom_call.1} parent=1 // pred_fallthru
      _
    // Predicated region
    $region26: #{tpu_custom_call.1} parent=1 // pred_check
      _
    $region27: #{tpu_custom_call.1} parent=1 // pred_check_branch
      %52 = sbr.rel (0) target = $region29
    $region28: #{tpu_custom_call.1} parent=1 // pred_region
      %53 = dma.done [#allocation7], 16
    $region29: #{tpu_custom_call.1} parent=1 // pred_fallthru
      _
    // Predicated region
    $region30: #{tpu_custom_call.1} parent=1 // pred_check
      _
    $region31: #{tpu_custom_call.1} parent=1 // pred_check_branch
      %55 = sbr.rel (0) target = $region33
    $region32: #{tpu_custom_call.1} parent=1 // pred_region
      %56 = dma.done [#allocation7], 16
    $region33: #{tpu_custom_call.1} parent=1 // pred_fallthru
      _
    %57 = sfence
    %s58 = sld [smem:[#allocation2]]
    %v59 = vld [vmem:[%s4] sm:$0xff]
    %s60 = sld [smem:[#allocation3]]
    %v61 = vstv %s60
    %v62 = vmul.f32 %v59, %v61
    %s63 = sld [smem:[#allocation6]]
    %v64 = vstv %s63
    %v65 = vadd.f32 %v62, %v64
    %v66 = vmax.f32 %v65, 0.0
    %s67 = sld [smem:[#allocation8]]
    %v68 = vstv %s67
    %v69 = vmul.f32 %v66, %v68
    %v70 = vadd.f32 %v69, 0.0
    %s71 = sld [smem:[#allocation3 + $0x1]]
    %v72 = vstv %s71
    %v73 = vmul.f32 %v59, %v72
    %s74 = sld [smem:[#allocation6 + $0x1]]
    %v75 = vstv %s74
    %v76 = vadd.f32 %v73, %v75
    %v77 = vmax.f32 %v76, 0.0
    %s78 = sld [smem:[#allocation8 + $0x1]]
    %v79 = vstv %s78
    %v80 = vmul.f32 %v77, %v79
    %v81 = vadd.f32 %v70, %v80
    %s82 = sld [smem:[#allocation3 + $0x2]]
    %v83 = vstv %s82
    %v84 = vmul.f32 %v59, %v83
    %s85 = sld [smem:[#allocation6 + $0x2]]
    %v86 = vstv %s85
    %v87 = vadd.f32 %v84, %v86
    %v88 = vmax.f32 %v87, 0.0
    %s89 = sld [smem:[#allocation8 + $0x2]]
    %v90 = vstv %s89
    %v91 = vmul.f32 %v88, %v90
    %v92 = vadd.f32 %v81, %v91
    %s93 = sld [smem:[#allocation3 + $0x3]]
    %v94 = vstv %s93
    %v95 = vmul.f32 %v59, %v94
    %s96 = sld [smem:[#allocation6 + $0x3]]
    %v97 = vstv %s96
    %v98 = vadd.f32 %v95, %v97
    %v99 = vmax.f32 %v98, 0.0
    %s100 = sld [smem:[#allocation8 + $0x3]]
    %v101 = vstv %s100
    %v102 = vmul.f32 %v99, %v101
    %v103 = vadd.f32 %v92, %v102
    %s104 = sld [smem:[#allocation3 + $0x4]]
    %v105 = vstv %s104
    %v106 = vmul.f32 %v59, %v105
    %s107 = sld [smem:[#allocation6 + $0x4]]
    %v108 = vstv %s107
    %v109 = vadd.f32 %v106, %v108
    %v110 = vmax.f32 %v109, 0.0
    %s111 = sld [smem:[#allocation8 + $0x4]]
    %v112 = vstv %s111
    %v113 = vmul.f32 %v110, %v112
    %v114 = vadd.f32 %v103, %v113
    %s115 = sld [smem:[#allocation3 + $0x5]]
    %v116 = vstv %s115
    %v117 = vmul.f32 %v59, %v116
    %s118 = sld [smem:[#allocation6 + $0x5]]
    %v119 = vstv %s118
    %v120 = vadd.f32 %v117, %v119
    %v121 = vmax.f32 %v120, 0.0
    %s122 = sld [smem:[#allocation8 + $0x5]]
    %v123 = vstv %s122
    %v124 = vmul.f32 %v121, %v123
    %v125 = vadd.f32 %v114, %v124
    %s126 = sld [smem:[#allocation3 + $0x6]]
    %v127 = vstv %s126
    %v128 = vmul.f32 %v59, %v127
    %s129 = sld [smem:[#allocation6 + $0x6]]
    %v130 = vstv %s129
    %v131 = vadd.f32 %v128, %v130
    %v132 = vmax.f32 %v131, 0.0
    %s133 = sld [smem:[#allocation8 + $0x6]]
    %v134 = vstv %s133
    %v135 = vmul.f32 %v132, %v134
    %v136 = vadd.f32 %v125, %v135
    %s137 = sld [smem:[#allocation3 + $0x7]]
    %v138 = vstv %s137
    %v139 = vmul.f32 %v59, %v138
    %s140 = sld [smem:[#allocation6 + $0x7]]
    %v141 = vstv %s140
    %v142 = vadd.f32 %v139, %v141
    %v143 = vmax.f32 %v142, 0.0
    %s144 = sld [smem:[#allocation8 + $0x7]]
    %v145 = vstv %s144
    %v146 = vmul.f32 %v143, %v145
    %v147 = vadd.f32 %v136, %v146
    %s148 = sld [smem:[#allocation3 + $0x8]]
    %v149 = vstv %s148
    %v150 = vmul.f32 %v59, %v149
    %s151 = sld [smem:[#allocation6 + $0x8]]
    %v152 = vstv %s151
    %v153 = vadd.f32 %v150, %v152
    %v154 = vmax.f32 %v153, 0.0
    %s155 = sld [smem:[#allocation8 + $0x8]]
    %v156 = vstv %s155
    %v157 = vmul.f32 %v154, %v156
    %v158 = vadd.f32 %v147, %v157
    %s159 = sld [smem:[#allocation3 + $0x9]]
    %v160 = vstv %s159
    %v161 = vmul.f32 %v59, %v160
    %s162 = sld [smem:[#allocation6 + $0x9]]
    %v163 = vstv %s162
    %v164 = vadd.f32 %v161, %v163
    %v165 = vmax.f32 %v164, 0.0
    %s166 = sld [smem:[#allocation8 + $0x9]]
    %v167 = vstv %s166
    %v168 = vmul.f32 %v165, %v167
    %v169 = vadd.f32 %v158, %v168
    %s170 = sld [smem:[#allocation3 + $0xa]]
    %v171 = vstv %s170
    %v172 = vmul.f32 %v59, %v171
    %s173 = sld [smem:[#allocation6 + $0xa]]
    %v174 = vstv %s173
    %v175 = vadd.f32 %v172, %v174
    %v176 = vmax.f32 %v175, 0.0
    %s177 = sld [smem:[#allocation8 + $0xa]]
    %v178 = vstv %s177
    %v179 = vmul.f32 %v176, %v178
    %v180 = vadd.f32 %v169, %v179
    %s181 = sld [smem:[#allocation3 + $0xb]]
    %v182 = vstv %s181
    %v183 = vmul.f32 %v59, %v182
    %s184 = sld [smem:[#allocation6 + $0xb]]
    %v185 = vstv %s184
    %v186 = vadd.f32 %v183, %v185
    %v187 = vmax.f32 %v186, 0.0
    %s188 = sld [smem:[#allocation8 + $0xb]]
    %v189 = vstv %s188
    %v190 = vmul.f32 %v187, %v189
    %v191 = vadd.f32 %v180, %v190
    %s192 = sld [smem:[#allocation3 + $0xc]]
    %v193 = vstv %s192
    %v194 = vmul.f32 %v59, %v193
    %s195 = sld [smem:[#allocation6 + $0xc]]
    %v196 = vstv %s195
    %v197 = vadd.f32 %v194, %v196
    %v198 = vmax.f32 %v197, 0.0
    %s199 = sld [smem:[#allocation8 + $0xc]]
    %v200 = vstv %s199
    %v201 = vmul.f32 %v198, %v200
    %v202 = vadd.f32 %v191, %v201
    %s203 = sld [smem:[#allocation3 + $0xd]]
    %v204 = vstv %s203
    %v205 = vmul.f32 %v59, %v204
    %s206 = sld [smem:[#allocation6 + $0xd]]
    %v207 = vstv %s206
    %v208 = vadd.f32 %v205, %v207
    %v209 = vmax.f32 %v208, 0.0
    %s210 = sld [smem:[#allocation8 + $0xd]]
    %v211 = vstv %s210
    %v212 = vmul.f32 %v209, %v211
    %v213 = vadd.f32 %v202, %v212
    %s214 = sld [smem:[#allocation3 + $0xe]]
    %v215 = vstv %s214
    %v216 = vmul.f32 %v59, %v215
    %s217 = sld [smem:[#allocation6 + $0xe]]
    %v218 = vstv %s217
    %v219 = vadd.f32 %v216, %v218
    %v220 = vmax.f32 %v219, 0.0
    %s221 = sld [smem:[#allocation8 + $0xe]]
    %v222 = vstv %s221
    %v223 = vmul.f32 %v220, %v222
    %v224 = vadd.f32 %v213, %v223
    %s225 = sld [smem:[#allocation3 + $0xf]]
    %v226 = vstv %s225
    %v227 = vmul.f32 %v59, %v226
    %s228 = sld [smem:[#allocation6 + $0xf]]
    %v229 = vstv %s228
    %v230 = vadd.f32 %v227, %v229
    %v231 = vmax.f32 %v230, 0.0
    %s232 = sld [smem:[#allocation8 + $0xf]]
    %v233 = vstv %s232
    %v234 = vmul.f32 %v231, %v233
    %v235 = vadd.f32 %v224, %v234
    %s236 = sld [smem:[#allocation3 + $0x10]]
    %v237 = vstv %s236
    %v238 = vmul.f32 %v59, %v237
    %s239 = sld [smem:[#allocation6 + $0x10]]
    %v240 = vstv %s239
    %v241 = vadd.f32 %v238, %v240
    %v242 = vmax.f32 %v241, 0.0
    %s243 = sld [smem:[#allocation8 + $0x10]]
    %v244 = vstv %s243
    %v245 = vmul.f32 %v242, %v244
    %v246 = vadd.f32 %v235, %v245
    %s247 = sld [smem:[#allocation3 + $0x11]]
    %v248 = vstv %s247
    %v249 = vmul.f32 %v59, %v248
    %s250 = sld [smem:[#allocation6 + $0x11]]
    %v251 = vstv %s250
    %v252 = vadd.f32 %v249, %v251
    %v253 = vmax.f32 %v252, 0.0
    %s254 = sld [smem:[#allocation8 + $0x11]]
    %v255 = vstv %s254
    %v256 = vmul.f32 %v253, %v255
    %v257 = vadd.f32 %v246, %v256
    %s258 = sld [smem:[#allocation3 + $0x12]]
    %v259 = vstv %s258
    %v260 = vmul.f32 %v59, %v259
    %s261 = sld [smem:[#allocation6 + $0x12]]
    %v262 = vstv %s261
    %v263 = vadd.f32 %v260, %v262
    %v264 = vmax.f32 %v263, 0.0
    %s265 = sld [smem:[#allocation8 + $0x12]]
    %v266 = vstv %s265
    %v267 = vmul.f32 %v264, %v266
    %v268 = vadd.f32 %v257, %v267
    %s269 = sld [smem:[#allocation3 + $0x13]]
    %v270 = vstv %s269
    %v271 = vmul.f32 %v59, %v270
    %s272 = sld [smem:[#allocation6 + $0x13]]
    %v273 = vstv %s272
    %v274 = vadd.f32 %v271, %v273
    %v275 = vmax.f32 %v274, 0.0
    %s276 = sld [smem:[#allocation8 + $0x13]]
    %v277 = vstv %s276
    %v278 = vmul.f32 %v275, %v277
    %v279 = vadd.f32 %v268, %v278
    %s280 = sld [smem:[#allocation3 + $0x14]]
    %v281 = vstv %s280
    %v282 = vmul.f32 %v59, %v281
    %s283 = sld [smem:[#allocation6 + $0x14]]
    %v284 = vstv %s283
    %v285 = vadd.f32 %v282, %v284
    %v286 = vmax.f32 %v285, 0.0
    %s287 = sld [smem:[#allocation8 + $0x14]]
    %v288 = vstv %s287
    %v289 = vmul.f32 %v286, %v288
    %v290 = vadd.f32 %v279, %v289
    %s291 = sld [smem:[#allocation3 + $0x15]]
    %v292 = vstv %s291
    %v293 = vmul.f32 %v59, %v292
    %s294 = sld [smem:[#allocation6 + $0x15]]
    %v295 = vstv %s294
    %v296 = vadd.f32 %v293, %v295
    %v297 = vmax.f32 %v296, 0.0
    %s298 = sld [smem:[#allocation8 + $0x15]]
    %v299 = vstv %s298
    %v300 = vmul.f32 %v297, %v299
    %v301 = vadd.f32 %v290, %v300
    %s302 = sld [smem:[#allocation3 + $0x16]]
    %v303 = vstv %s302
    %v304 = vmul.f32 %v59, %v303
    %s305 = sld [smem:[#allocation6 + $0x16]]
    %v306 = vstv %s305
    %v307 = vadd.f32 %v304, %v306
    %v308 = vmax.f32 %v307, 0.0
    %s309 = sld [smem:[#allocation8 + $0x16]]
    %v310 = vstv %s309
    %v311 = vmul.f32 %v308, %v310
    %v312 = vadd.f32 %v301, %v311
    %s313 = sld [smem:[#allocation3 + $0x17]]
    %v314 = vstv %s313
    %v315 = vmul.f32 %v59, %v314
    %s316 = sld [smem:[#allocation6 + $0x17]]
    %v317 = vstv %s316
    %v318 = vadd.f32 %v315, %v317
    %v319 = vmax.f32 %v318, 0.0
    %s320 = sld [smem:[#allocation8 + $0x17]]
    %v321 = vstv %s320
    %v322 = vmul.f32 %v319, %v321
    %v323 = vadd.f32 %v312, %v322
    %s324 = sld [smem:[#allocation3 + $0x18]]
    %v325 = vstv %s324
    %v326 = vmul.f32 %v59, %v325
    %s327 = sld [smem:[#allocation6 + $0x18]]
    %v328 = vstv %s327
    %v329 = vadd.f32 %v326, %v328
    %v330 = vmax.f32 %v329, 0.0
    %s331 = sld [smem:[#allocation8 + $0x18]]
    %v332 = vstv %s331
    %v333 = vmul.f32 %v330, %v332
    %v334 = vadd.f32 %v323, %v333
    %s335 = sld [smem:[#allocation3 + $0x19]]
    %v336 = vstv %s335
    %v337 = vmul.f32 %v59, %v336
    %s338 = sld [smem:[#allocation6 + $0x19]]
    %v339 = vstv %s338
    %v340 = vadd.f32 %v337, %v339
    %v341 = vmax.f32 %v340, 0.0
    %s342 = sld [smem:[#allocation8 + $0x19]]
    %v343 = vstv %s342
    %v344 = vmul.f32 %v341, %v343
    %v345 = vadd.f32 %v334, %v344
    %s346 = sld [smem:[#allocation3 + $0x1a]]
    %v347 = vstv %s346
    %v348 = vmul.f32 %v59, %v347
    %s349 = sld [smem:[#allocation6 + $0x1a]]
    %v350 = vstv %s349
    %v351 = vadd.f32 %v348, %v350
    %v352 = vmax.f32 %v351, 0.0
    %s353 = sld [smem:[#allocation8 + $0x1a]]
    %v354 = vstv %s353
    %v355 = vmul.f32 %v352, %v354
    %v356 = vadd.f32 %v345, %v355
    %s357 = sld [smem:[#allocation3 + $0x1b]]
    %v358 = vstv %s357
    %v359 = vmul.f32 %v59, %v358
    %s360 = sld [smem:[#allocation6 + $0x1b]]
    %v361 = vstv %s360
    %v362 = vadd.f32 %v359, %v361
    %v363 = vmax.f32 %v362, 0.0
    %s364 = sld [smem:[#allocation8 + $0x1b]]
    %v365 = vstv %s364
    %v366 = vmul.f32 %v363, %v365
    %v367 = vadd.f32 %v356, %v366
    %s368 = sld [smem:[#allocation3 + $0x1c]]
    %v369 = vstv %s368
    %v370 = vmul.f32 %v59, %v369
    %s371 = sld [smem:[#allocation6 + $0x1c]]
    %v372 = vstv %s371
    %v373 = vadd.f32 %v370, %v372
    %v374 = vmax.f32 %v373, 0.0
    %s375 = sld [smem:[#allocation8 + $0x1c]]
    %v376 = vstv %s375
    %v377 = vmul.f32 %v374, %v376
    %v378 = vadd.f32 %v367, %v377
    %s379 = sld [smem:[#allocation3 + $0x1d]]
    %v380 = vstv %s379
    %v381 = vmul.f32 %v59, %v380
    %s382 = sld [smem:[#allocation6 + $0x1d]]
    %v383 = vstv %s382
    %v384 = vadd.f32 %v381, %v383
    %v385 = vmax.f32 %v384, 0.0
    %s386 = sld [smem:[#allocation8 + $0x1d]]
    %v387 = vstv %s386
    %v388 = vmul.f32 %v385, %v387
    %v389 = vadd.f32 %v378, %v388
    %s390 = sld [smem:[#allocation3 + $0x1e]]
    %v391 = vstv %s390
    %v392 = vmul.f32 %v59, %v391
    %s393 = sld [smem:[#allocation6 + $0x1e]]
    %v394 = vstv %s393
    %v395 = vadd.f32 %v392, %v394
    %v396 = vmax.f32 %v395, 0.0
    %s397 = sld [smem:[#allocation8 + $0x1e]]
    %v398 = vstv %s397
    %v399 = vmul.f32 %v396, %v398
    %v400 = vadd.f32 %v389, %v399
    %s401 = sld [smem:[#allocation3 + $0x1f]]
    %v402 = vstv %s401
    %v403 = vmul.f32 %v59, %v402
    %s404 = sld [smem:[#allocation6 + $0x1f]]
    %v405 = vstv %s404
    %v406 = vadd.f32 %v403, %v405
    %v407 = vmax.f32 %v406, 0.0
    %s408 = sld [smem:[#allocation8 + $0x1f]]
    %v409 = vstv %s408
    %v410 = vmul.f32 %v407, %v409
    %v411 = vadd.f32 %v400, %v410
    %s412 = sld [smem:[#allocation3 + $0x20]]
    %v413 = vstv %s412
    %v414 = vmul.f32 %v59, %v413
    %s415 = sld [smem:[#allocation6 + $0x20]]
    %v416 = vstv %s415
    %v417 = vadd.f32 %v414, %v416
    %v418 = vmax.f32 %v417, 0.0
    %s419 = sld [smem:[#allocation8 + $0x20]]
    %v420 = vstv %s419
    %v421 = vmul.f32 %v418, %v420
    %v422 = vadd.f32 %v411, %v421
    %s423 = sld [smem:[#allocation3 + $0x21]]
    %v424 = vstv %s423
    %v425 = vmul.f32 %v59, %v424
    %s426 = sld [smem:[#allocation6 + $0x21]]
    %v427 = vstv %s426
    %v428 = vadd.f32 %v425, %v427
    %v429 = vmax.f32 %v428, 0.0
    %s430 = sld [smem:[#allocation8 + $0x21]]
    %v431 = vstv %s430
    %v432 = vmul.f32 %v429, %v431
    %v433 = vadd.f32 %v422, %v432
    %s434 = sld [smem:[#allocation3 + $0x22]]
    %v435 = vstv %s434
    %v436 = vmul.f32 %v59, %v435
    %s437 = sld [smem:[#allocation6 + $0x22]]
    %v438 = vstv %s437
    %v439 = vadd.f32 %v436, %v438
    %v440 = vmax.f32 %v439, 0.0
    %s441 = sld [smem:[#allocation8 + $0x22]]
    %v442 = vstv %s441
    %v443 = vmul.f32 %v440, %v442
    %v444 = vadd.f32 %v433, %v443
    %s445 = sld [smem:[#allocation3 + $0x23]]
    %v446 = vstv %s445
    %v447 = vmul.f32 %v59, %v446
    %s448 = sld [smem:[#allocation6 + $0x23]]
    %v449 = vstv %s448
    %v450 = vadd.f32 %v447, %v449
    %v451 = vmax.f32 %v450, 0.0
    %s452 = sld [smem:[#allocation8 + $0x23]]
    %v453 = vstv %s452
    %v454 = vmul.f32 %v451, %v453
    %v455 = vadd.f32 %v444, %v454
    %s456 = sld [smem:[#allocation3 + $0x24]]
    %v457 = vstv %s456
    %v458 = vmul.f32 %v59, %v457
    %s459 = sld [smem:[#allocation6 + $0x24]]
    %v460 = vstv %s459
    %v461 = vadd.f32 %v458, %v460
    %v462 = vmax.f32 %v461, 0.0
    %s463 = sld [smem:[#allocation8 + $0x24]]
    %v464 = vstv %s463
    %v465 = vmul.f32 %v462, %v464
    %v466 = vadd.f32 %v455, %v465
    %s467 = sld [smem:[#allocation3 + $0x25]]
    %v468 = vstv %s467
    %v469 = vmul.f32 %v59, %v468
    %s470 = sld [smem:[#allocation6 + $0x25]]
    %v471 = vstv %s470
    %v472 = vadd.f32 %v469, %v471
    %v473 = vmax.f32 %v472, 0.0
    %s474 = sld [smem:[#allocation8 + $0x25]]
    %v475 = vstv %s474
    %v476 = vmul.f32 %v473, %v475
    %v477 = vadd.f32 %v466, %v476
    %s478 = sld [smem:[#allocation3 + $0x26]]
    %v479 = vstv %s478
    %v480 = vmul.f32 %v59, %v479
    %s481 = sld [smem:[#allocation6 + $0x26]]
    %v482 = vstv %s481
    %v483 = vadd.f32 %v480, %v482
    %v484 = vmax.f32 %v483, 0.0
    %s485 = sld [smem:[#allocation8 + $0x26]]
    %v486 = vstv %s485
    %v487 = vmul.f32 %v484, %v486
    %v488 = vadd.f32 %v477, %v487
    %s489 = sld [smem:[#allocation3 + $0x27]]
    %v490 = vstv %s489
    %v491 = vmul.f32 %v59, %v490
    %s492 = sld [smem:[#allocation6 + $0x27]]
    %v493 = vstv %s492
    %v494 = vadd.f32 %v491, %v493
    %v495 = vmax.f32 %v494, 0.0
    %s496 = sld [smem:[#allocation8 + $0x27]]
    %v497 = vstv %s496
    %v498 = vmul.f32 %v495, %v497
    %v499 = vadd.f32 %v488, %v498
    %s500 = sld [smem:[#allocation3 + $0x28]]
    %v501 = vstv %s500
    %v502 = vmul.f32 %v59, %v501
    %s503 = sld [smem:[#allocation6 + $0x28]]
    %v504 = vstv %s503
    %v505 = vadd.f32 %v502, %v504
    %v506 = vmax.f32 %v505, 0.0
    %s507 = sld [smem:[#allocation8 + $0x28]]
    %v508 = vstv %s507
    %v509 = vmul.f32 %v506, %v508
    %v510 = vadd.f32 %v499, %v509
    %s511 = sld [smem:[#allocation3 + $0x29]]
    %v512 = vstv %s511
    %v513 = vmul.f32 %v59, %v512
    %s514 = sld [smem:[#allocation6 + $0x29]]
    %v515 = vstv %s514
    %v516 = vadd.f32 %v513, %v515
    %v517 = vmax.f32 %v516, 0.0
    %s518 = sld [smem:[#allocation8 + $0x29]]
    %v519 = vstv %s518
    %v520 = vmul.f32 %v517, %v519
    %v521 = vadd.f32 %v510, %v520
    %s522 = sld [smem:[#allocation3 + $0x2a]]
    %v523 = vstv %s522
    %v524 = vmul.f32 %v59, %v523
    %s525 = sld [smem:[#allocation6 + $0x2a]]
    %v526 = vstv %s525
    %v527 = vadd.f32 %v524, %v526
    %v528 = vmax.f32 %v527, 0.0
    %s529 = sld [smem:[#allocation8 + $0x2a]]
    %v530 = vstv %s529
    %v531 = vmul.f32 %v528, %v530
    %v532 = vadd.f32 %v521, %v531
    %s533 = sld [smem:[#allocation3 + $0x2b]]
    %v534 = vstv %s533
    %v535 = vmul.f32 %v59, %v534
    %s536 = sld [smem:[#allocation6 + $0x2b]]
    %v537 = vstv %s536
    %v538 = vadd.f32 %v535, %v537
    %v539 = vmax.f32 %v538, 0.0
    %s540 = sld [smem:[#allocation8 + $0x2b]]
    %v541 = vstv %s540
    %v542 = vmul.f32 %v539, %v541
    %v543 = vadd.f32 %v532, %v542
    %s544 = sld [smem:[#allocation3 + $0x2c]]
    %v545 = vstv %s544
    %v546 = vmul.f32 %v59, %v545
    %s547 = sld [smem:[#allocation6 + $0x2c]]
    %v548 = vstv %s547
    %v549 = vadd.f32 %v546, %v548
    %v550 = vmax.f32 %v549, 0.0
    %s551 = sld [smem:[#allocation8 + $0x2c]]
    %v552 = vstv %s551
    %v553 = vmul.f32 %v550, %v552
    %v554 = vadd.f32 %v543, %v553
    %s555 = sld [smem:[#allocation3 + $0x2d]]
    %v556 = vstv %s555
    %v557 = vmul.f32 %v59, %v556
    %s558 = sld [smem:[#allocation6 + $0x2d]]
    %v559 = vstv %s558
    %v560 = vadd.f32 %v557, %v559
    %v561 = vmax.f32 %v560, 0.0
    %s562 = sld [smem:[#allocation8 + $0x2d]]
    %v563 = vstv %s562
    %v564 = vmul.f32 %v561, %v563
    %v565 = vadd.f32 %v554, %v564
    %s566 = sld [smem:[#allocation3 + $0x2e]]
    %v567 = vstv %s566
    %v568 = vmul.f32 %v59, %v567
    %s569 = sld [smem:[#allocation6 + $0x2e]]
    %v570 = vstv %s569
    %v571 = vadd.f32 %v568, %v570
    %v572 = vmax.f32 %v571, 0.0
    %s573 = sld [smem:[#allocation8 + $0x2e]]
    %v574 = vstv %s573
    %v575 = vmul.f32 %v572, %v574
    %v576 = vadd.f32 %v565, %v575
    %s577 = sld [smem:[#allocation3 + $0x2f]]
    %v578 = vstv %s577
    %v579 = vmul.f32 %v59, %v578
    %s580 = sld [smem:[#allocation6 + $0x2f]]
    %v581 = vstv %s580
    %v582 = vadd.f32 %v579, %v581
    %v583 = vmax.f32 %v582, 0.0
    %s584 = sld [smem:[#allocation8 + $0x2f]]
    %v585 = vstv %s584
    %v586 = vmul.f32 %v583, %v585
    %v587 = vadd.f32 %v576, %v586
    %s588 = sld [smem:[#allocation3 + $0x30]]
    %v589 = vstv %s588
    %v590 = vmul.f32 %v59, %v589
    %s591 = sld [smem:[#allocation6 + $0x30]]
    %v592 = vstv %s591
    %v593 = vadd.f32 %v590, %v592
    %v594 = vmax.f32 %v593, 0.0
    %s595 = sld [smem:[#allocation8 + $0x30]]
    %v596 = vstv %s595
    %v597 = vmul.f32 %v594, %v596
    %v598 = vadd.f32 %v587, %v597
    %s599 = sld [smem:[#allocation3 + $0x31]]
    %v600 = vstv %s599
    %v601 = vmul.f32 %v59, %v600
    %s602 = sld [smem:[#allocation6 + $0x31]]
    %v603 = vstv %s602
    %v604 = vadd.f32 %v601, %v603
    %v605 = vmax.f32 %v604, 0.0
    %s606 = sld [smem:[#allocation8 + $0x31]]
    %v607 = vstv %s606
    %v608 = vmul.f32 %v605, %v607
    %v609 = vadd.f32 %v598, %v608
    %v610 = vstv %s58
    %v611 = vadd.f32 %v609, %v610
    %v612 = vmul.f32 %v611, 0.5
    %v613 = vtanh.pop %v612
    %v614 = vmul.f32 %v613, 0.5
    %v615 = vadd.f32 %v614, 0.5
    %616 = vst [vmem:[#allocation9] sm:$0xff] %v615
    // Predicated region
    $region34: #{tpu_custom_call.1} parent=1 // pred_check
      _
    $region35: #{tpu_custom_call.1} parent=1 // pred_check_branch
      %618 = sbr.rel (0) target = $region37
    $region36: #{tpu_custom_call.1} parent=1 // pred_region
      %s620 = ssub.s32 128, 128
      %621 = vsyncadd [#allocation4], %s620
      %s623 = sshll.u32 [#allocation9], 4
      %s624 = int_to_ptr.vmem [resolvable:$true] %s623
      %626 = dma.vmem_to_hbm [thread:$0]  %s624, 128, %s5, [#allocation4]
    $region37: #{tpu_custom_call.1} parent=1 // pred_fallthru
      _
    // Predicated region
    $region38: #{tpu_custom_call.1} parent=1 // pred_check
      _
    $region39: #{tpu_custom_call.1} parent=1 // pred_check_branch
      %628 = sbr.rel (0) target = $region41
    $region40: #{tpu_custom_call.1} parent=1 // pred_region
      %629 = dma.done [#allocation4], 128
    $region41: #{tpu_custom_call.1} parent=1 // pred_fallthru
      _
    %630 = vsyncpa [#allocation4], 1
    %631 = vsyncpa [#allocation5], 1
    %632 = vsyncpa [#allocation7], 1

</llo_original>
